<compile_context>
chip_gen: v5e
topology: v5e:2x2
jax: 0.10.0
libtpu: 0.0.40
codegen_flags: <defaults>
</compile_context>

<pallas_src>
import functools

import jax
import jax.numpy as jnp
import numpy as np
from jax.experimental import pallas as pl
from jax.experimental.pallas import tpu as pltpu


# ----------------------------------------------------------------------------
# Fused kernel: one (batch, row-tile) step.
#   arc_ref   : (1, TS, S)  f32   rows of arc scores for this tile
#   mask_ref  : (1, TS, 1)  i32   per-row mask (sublane oriented)
#   hrep_ref  : (1, S,  D)  f32   full head_tag_representation for this batch
#   child_ref : (1, TS, D)  f32   child_tag_representation rows of this tile
#   w2_ref    : (D, D*Lp)   f32   W2[j, k*Lp + l] = W[l, j, k]  (Lp = padded L)
#   bias_ref  : (1, Lp)     f32   bias (padded labels = -1e30)
#   heads_ref : (1, 1, TS)  i32   lane-dense output
#   tags_ref  : (1, 1, TS)  i32   lane-dense output
# ----------------------------------------------------------------------------
def _fused_greedy_kernel(arc_ref, mask_ref, hrep_ref, child_ref, w2_ref,
                         bias_ref, heads_ref, tags_ref):
    TS = arc_ref.shape[1]
    S = arc_ref.shape[2]
    D = child_ref.shape[2]
    Lp = bias_ref.shape[1]

    t = pl.program_id(1)
    neg_inf = jnp.float32(-jnp.inf)

    # ---- masked arc argmax (greedy heads), first-max-index tie break --------
    arc = arc_ref[0]                                           # (TS, S)
    mcol = mask_ref[0]                                         # (TS, 1) i32
    col_s = jax.lax.broadcasted_iota(jnp.int32, (TS, S), 1)
    row_l = jax.lax.broadcasted_iota(jnp.int32, (TS, S), 0)
    grow = row_l + t * TS                                      # global row idx
    attended = jnp.where(col_s == grow, neg_inf, arc)          # diag -> -inf
    attended = jnp.where(mcol == 0, neg_inf, attended)         # masked rows
    mx = jnp.max(attended, axis=1, keepdims=True)
    cand = jnp.where(attended == mx, col_s, S)
    heads_col = jnp.min(cand, axis=1, keepdims=True)           # (TS, 1) i32

    # ---- gather head representations as a one-hot MXU matmul ---------------
    onehot = (col_s == heads_col).astype(jnp.float32)          # (TS, S)
    sel = jnp.dot(onehot, hrep_ref[0],
                  preferred_element_type=jnp.float32)          # (TS, D)

    # ---- bilinear: U = sel @ W2, then accumulate over k in 128-lane chunks --
    u = jnp.dot(sel, w2_ref[...],
                preferred_element_type=jnp.float32)            # (TS, D*Lp)
    child = child_ref[0]                                       # (TS, D)
    lane_d = jax.lax.broadcasted_iota(jnp.int32, (TS, D), 1)
    acc = jnp.zeros((TS, Lp), jnp.float32)
    for k in range(D):                                         # static unroll
        # child[:, k] as a (TS, 1) column (lane-broadcastable), no unaligned
        # lane slicing needed.
        ck = jnp.sum(jnp.where(lane_d == k, child, 0.0),
                     axis=1, keepdims=True)                    # (TS, 1)
        acc = acc + u[:, k * Lp:(k + 1) * Lp] * ck             # lane-aligned
    logits = acc + bias_ref[...]                               # (TS, Lp)

    # ---- label argmax (first-max-index) -------------------------------------
    col_l = jax.lax.broadcasted_iota(jnp.int32, (TS, Lp), 1)
    mxl = jnp.max(logits, axis=1, keepdims=True)
    candl = jnp.where(logits == mxl, col_l, Lp)
    tags_col = jnp.min(candl, axis=1, keepdims=True)           # (TS, 1) i32

    # ---- move per-row results from sublanes to lanes (lane-dense stores) ----
    r = jax.lax.broadcasted_iota(jnp.int32, (TS, TS), 0)
    c = jax.lax.broadcasted_iota(jnp.int32, (TS, TS), 1)
    eye = r == c
    heads_row = jnp.sum(jnp.where(eye, heads_col.astype(jnp.float32), 0.0),
                        axis=0, keepdims=True)                 # (1, TS)
    tags_row = jnp.sum(jnp.where(eye, tags_col.astype(jnp.float32), 0.0),
                       axis=0, keepdims=True)                  # (1, TS)
    heads_ref[0] = heads_row.astype(jnp.int32)
    tags_ref[0] = tags_row.astype(jnp.int32)


@functools.partial(jax.jit, static_argnames=("row_tile",))
def greedy_decoding_pallas(head_tag_rep, child_tag_rep, arc_scores, mask,
                           bilinear_w, bilinear_b, *, row_tile=None):
    """Fused Pallas version of BaseDependencyDecoder.greedy_decoding.

    head_tag_rep / child_tag_rep: (B, S, D) float32
    arc_scores:                   (B, S, S) float32
    mask:                         (B, S)    int
    bilinear_w:                   (L, D, D) float32   (torch.nn.Bilinear weight)
    bilinear_b:                   (L,)      float32   (torch.nn.Bilinear bias)
    returns (heads, head_tags): both (B, S) int32
    """
    B, S, D = head_tag_rep.shape
    L = bilinear_w.shape[0]

    if row_tile is None:
        row_tile = S
    # Row tile must be the full sequence or a lane-friendly multiple of 128.
    assert S % row_tile == 0 and (row_tile == S or row_tile % 128 == 0)
    T = S // row_tile
    Lp = ((L + 127) // 128) * 128                       # pad labels to lanes

    f32 = jnp.float32
    arc = arc_scores.astype(f32)
    hrep = head_tag_rep.astype(f32)
    child = child_tag_rep.astype(f32)
    mask3 = mask.astype(jnp.int32)[:, :, None]          # (B, S, 1)

    # W2[j, k*Lp + l] = W[l, j, k]; padded labels get zero weight / -1e30 bias.
    w_pad = jnp.zeros((Lp, D, D), f32).at[:L, :, :].set(bilinear_w.astype(f32))
    w2 = jnp.transpose(w_pad, (1, 2, 0)).reshape(D, D * Lp)
    bias_pad = jnp.full((1, Lp), -1e30, f32).at[0, :L].set(bilinear_b.astype(f32))

    bytes_accessed = 4 * (arc.size + mask3.size + hrep.size + child.size
                          + w2.size + bias_pad.size + 2 * B * S)
    flops = 2 * B * S * (S * D + D * D * Lp + D * Lp)

    heads3, tags3 = pl.pallas_call(
        _fused_greedy_kernel,
        grid=(B, T),
        in_specs=[
            pl.BlockSpec((1, row_tile, S), lambda b, t: (b, t, 0)),   # arc rows
            pl.BlockSpec((1, row_tile, 1), lambda b, t: (b, t, 0)),   # mask
            pl.BlockSpec((1, S, D), lambda b, t: (b, 0, 0)),          # head rep
            pl.BlockSpec((1, row_tile, D), lambda b, t: (b, t, 0)),   # child rep
            pl.BlockSpec((D, D * Lp), lambda b, t: (0, 0)),           # W2
            pl.BlockSpec((1, Lp), lambda b, t: (0, 0)),               # bias
        ],
        out_specs=(
            pl.BlockSpec((1, 1, row_tile), lambda b, t: (b, 0, t)),
            pl.BlockSpec((1, 1, row_tile), lambda b, t: (b, 0, t)),
        ),
        out_shape=(
            jax.ShapeDtypeStruct((B, 1, S), jnp.int32),
            jax.ShapeDtypeStruct((B, 1, S), jnp.int32),
        ),
        compiler_params=pltpu.CompilerParams(
            dimension_semantics=("parallel", "parallel"),
            vmem_limit_bytes=32 * 1024 * 1024,
        ),
        cost_estimate=pl.CostEstimate(
            flops=int(flops), transcendentals=0,
            bytes_accessed=int(bytes_accessed)),
    )(arc, mask3, hrep, child, w2, bias_pad)

    return heads3[:, 0, :], tags3[:, 0, :]


# ----------------------------------------------------------------------------
# Pure-JAX reference (mirrors the torch semantics) for verification.
# ----------------------------------------------------------------------------
def greedy_decoding_reference(head_tag_rep, child_tag_rep, arc_scores, mask,
                              bilinear_w, bilinear_b):
    B, S, D = head_tag_rep.shape
    attended = arc_scores + jnp.where(jnp.eye(S, dtype=bool), -jnp.inf, 0.0)
    attended = jnp.where((mask == 0)[:, :, None], -jnp.inf, attended)
    heads = jnp.argmax(attended, axis=2)
    sel = jnp.take_along_axis(head_tag_rep, heads[:, :, None], axis=1)
    logits = jnp.einsum('bsj,ljk,bsk->bsl', sel, bilinear_w, child_tag_rep)
    logits = logits + bilinear_b[None, None, :]
    head_tags = jnp.argmax(logits, axis=2)
    return heads.astype(jnp.int32), head_tags.astype(jnp.int32)


if __name__ == "__main__":
    # Small shapes consistent with the module's forward semantics.
    B, S, D, L = 2, 8, 32, 16   # batch, seq, tag_representation_dim, num_labels

    key = jax.random.PRNGKey(0)
    k1, k2, k3, k4, k5 = jax.random.split(key, 5)

    head_tag_rep = jax.random.normal(k1, (B, S, D), dtype=jnp.float32)
    child_tag_rep = jax.random.normal(k2, (B, S, D), dtype=jnp.float32)
    arc_scores = jax.random.normal(k3, (B, S, S), dtype=jnp.float32)
    mask = jnp.array([[1, 1, 1, 1, 1, 1, 0, 0],
                      [1, 1, 1, 1, 1, 1, 1, 1]], dtype=jnp.int32)

    # Deterministic torch.nn.Bilinear-style init: U(-1/sqrt(D), 1/sqrt(D)).
    bound = 1.0 / np.sqrt(D)
    bilinear_w = jax.random.uniform(k4, (L, D, D), minval=-bound, maxval=bound,
                                    dtype=jnp.float32)
    bilinear_b = jax.random.uniform(k5, (L,), minval=-bound, maxval=bound,
                                    dtype=jnp.float32)

    heads, head_tags = greedy_decoding_pallas(
        head_tag_rep, child_tag_rep, arc_scores, mask, bilinear_w, bilinear_b)
    jax.block_until_ready((heads, head_tags))

    ref_heads, ref_tags = greedy_decoding_reference(
        head_tag_rep, child_tag_rep, arc_scores, mask, bilinear_w, bilinear_b)

    assert np.array_equal(np.asarray(heads), np.asarray(ref_heads)), "heads mismatch"
    assert np.array_equal(np.asarray(head_tags), np.asarray(ref_tags)), "tags mismatch"

    print("KERNEL_OK")
</pallas_src>

<mosaic_0001>
module attributes {stable_mosaic.version = 11 : i64} {
  func.func @_fused_greedy_kernel(%arg0: i32, %arg1: i32, %arg2: memref<1x8x8xf32, #tpu.memory_space<vmem>>, %arg3: memref<1x8x1xi32, #tpu.memory_space<vmem>>, %arg4: memref<1x8x32xf32, #tpu.memory_space<vmem>>, %arg5: memref<1x8x32xf32, #tpu.memory_space<vmem>>, %arg6: memref<32x4096xf32, #tpu.memory_space<vmem>>, %arg7: memref<1x128xf32, #tpu.memory_space<vmem>>, %arg8: memref<1x1x8xi32, #tpu.memory_space<vmem>>, %arg9: memref<1x1x8xi32, #tpu.memory_space<vmem>>) attributes {dimension_semantics = [#tpu.dimension_semantics<parallel>, #tpu.dimension_semantics<parallel>], iteration_bounds = array<i64: 2, 1>, scalar_prefetch = 0 : i64, scratch_operands = 0 : i64, tpu.core_type = #tpu.core_type<tc>, window_params = [{transform_indices = @transform_0, window_bounds = array<i64: 1, 8, 8>}, {transform_indices = @transform_1, window_bounds = array<i64: 1, 8, 1>}, {transform_indices = @transform_2, window_bounds = array<i64: 1, 8, 32>}, {transform_indices = @transform_3, window_bounds = array<i64: 1, 8, 32>}, {pipeline_mode = #tpu.pipeline_mode<synchronous>, transform_indices = @transform_4, window_bounds = array<i64: 32, 4096>}, {pipeline_mode = #tpu.pipeline_mode<synchronous>, transform_indices = @transform_5, window_bounds = array<i64: 1, 128>}, {transform_indices = @transform_6, window_bounds = array<i64: 1, 1, 8>}, {transform_indices = @transform_7, window_bounds = array<i64: 1, 1, 8>}]} {
    %c0 = arith.constant 0 : index
    %c0_0 = arith.constant 0 : index
    %c0_1 = arith.constant 0 : index
    %0 = vector.load %arg2[%c0, %c0_0, %c0_1] : memref<1x8x8xf32, #tpu.memory_space<vmem>>, vector<1x8x8xf32>
    %1 = vector.shape_cast %0 : vector<1x8x8xf32> to vector<8x8xf32>
    %c0_2 = arith.constant 0 : index
    %c0_3 = arith.constant 0 : index
    %c0_4 = arith.constant 0 : index
    %2 = vector.load %arg3[%c0_2, %c0_3, %c0_4] : memref<1x8x1xi32, #tpu.memory_space<vmem>>, vector<1x8x1xi32>
    %3 = vector.shape_cast %2 : vector<1x8x1xi32> to vector<8x1xi32>
    %4 = tpu.iota {dimensions = array<i32: 1>} : vector<8x8xi32>
    %5 = tpu.iota {dimensions = array<i32: 0>} : vector<8x8xi32>
    %c8_i32 = arith.constant 8 : i32
    %6 = arith.muli %arg1, %c8_i32 : i32
    %7 = vector.broadcast %6 : i32 to vector<8x8xi32>
    %8 = arith.addi %5, %7 : vector<8x8xi32>
    %9 = arith.cmpi eq, %4, %8 : vector<8x8xi32>
    %cst = arith.constant 0xFF800000 : f32
    %10 = vector.broadcast %cst : f32 to vector<8x8xf32>
    %11 = arith.select %9, %10, %1 : vector<8x8xi1>, vector<8x8xf32>
    %c0_i32 = arith.constant 0 : i32
    %12 = vector.broadcast %c0_i32 : i32 to vector<8x1xi32>
    %13 = arith.cmpi eq, %3, %12 : vector<8x1xi32>
    %cst_5 = arith.constant 0xFF800000 : f32
    %14 = vector.shape_cast %13 : vector<8x1xi1> to vector<8x1xi1>
    %15 = vector.broadcast %14 : vector<8x1xi1> to vector<8x8xi1>
    %16 = vector.broadcast %cst_5 : f32 to vector<8x8xf32>
    %17 = arith.select %15, %16, %11 : vector<8x8xi1>, vector<8x8xf32>
    %cst_6 = arith.constant dense<0xFF800000> : vector<8xf32>
    %18 = vector.multi_reduction <maximumf>, %17, %cst_6 [1] : vector<8x8xf32> to vector<8xf32>
    %19 = vector.shape_cast %18 : vector<8xf32> to vector<8x1xf32>
    %20 = vector.broadcast %19 : vector<8x1xf32> to vector<8x8xf32>
    %21 = arith.cmpf oeq, %17, %20 : vector<8x8xf32>
    %c8_i32_7 = arith.constant 8 : i32
    %22 = vector.broadcast %c8_i32_7 : i32 to vector<8x8xi32>
    %23 = arith.select %21, %4, %22 : vector<8x8xi1>, vector<8x8xi32>
    %cst_8 = arith.constant dense<2147483647> : vector<8xi32>
    %24 = vector.multi_reduction <minsi>, %23, %cst_8 [1] : vector<8x8xi32> to vector<8xi32>
    %25 = vector.shape_cast %24 : vector<8xi32> to vector<8x1xi32>
    %26 = vector.broadcast %25 : vector<8x1xi32> to vector<8x8xi32>
    %27 = arith.cmpi eq, %4, %26 : vector<8x8xi32>
    %28 = arith.extui %27 : vector<8x8xi1> to vector<8x8xi32>
    %29 = arith.sitofp %28 : vector<8x8xi32> to vector<8x8xf32>
    %c0_9 = arith.constant 0 : index
    %c0_10 = arith.constant 0 : index
    %c0_11 = arith.constant 0 : index
    %30 = vector.load %arg4[%c0_9, %c0_10, %c0_11] : memref<1x8x32xf32, #tpu.memory_space<vmem>>, vector<1x8x32xf32>
    %31 = vector.shape_cast %30 : vector<1x8x32xf32> to vector<8x32xf32>
    %cst_12 = arith.constant dense<0.000000e+00> : vector<8x32xf32>
    %32 = tpu.matmul %29, %31, %cst_12 {dimension_numbers = #tpu.dot_dimension_numbers<[1], [0], [0], [1], [0, 0, 1, 1], [], []>} : vector<8x8xf32>, vector<8x32xf32>, vector<8x32xf32> -> vector<8x32xf32>
    %c0_13 = arith.constant 0 : index
    %c0_14 = arith.constant 0 : index
    %33 = vector.load %arg6[%c0_13, %c0_14] : memref<32x4096xf32, #tpu.memory_space<vmem>>, vector<32x4096xf32>
    %cst_15 = arith.constant dense<0.000000e+00> : vector<8x4096xf32>
    %34 = tpu.matmul %32, %33, %cst_15 {dimension_numbers = #tpu.dot_dimension_numbers<[1], [0], [0], [1], [0, 0, 1, 1], [], []>} : vector<8x32xf32>, vector<32x4096xf32>, vector<8x4096xf32> -> vector<8x4096xf32>
    %c0_16 = arith.constant 0 : index
    %c0_17 = arith.constant 0 : index
    %c0_18 = arith.constant 0 : index
    %35 = vector.load %arg5[%c0_16, %c0_17, %c0_18] : memref<1x8x32xf32, #tpu.memory_space<vmem>>, vector<1x8x32xf32>
    %36 = vector.shape_cast %35 : vector<1x8x32xf32> to vector<8x32xf32>
    %37 = tpu.iota {dimensions = array<i32: 1>} : vector<8x32xi32>
    %cst_19 = arith.constant 0.000000e+00 : f32
    %38 = vector.broadcast %cst_19 : f32 to vector<8x128xf32>
    %c0_i32_20 = arith.constant 0 : i32
    %39 = vector.broadcast %c0_i32_20 : i32 to vector<8x32xi32>
    %40 = arith.cmpi eq, %37, %39 : vector<8x32xi32>
    %cst_21 = arith.constant 0.000000e+00 : f32
    %41 = vector.broadcast %cst_21 : f32 to vector<8x32xf32>
    %42 = arith.select %40, %36, %41 : vector<8x32xi1>, vector<8x32xf32>
    %cst_22 = arith.constant dense<0.000000e+00> : vector<8xf32>
    %43 = vector.multi_reduction <add>, %42, %cst_22 [1] : vector<8x32xf32> to vector<8xf32>
    %44 = vector.shape_cast %43 : vector<8xf32> to vector<8x1xf32>
    %45 = vector.extract_strided_slice %34 {offsets = [0, 0], sizes = [8, 128], strides = [1, 1]} : vector<8x4096xf32> to vector<8x128xf32>
    %46 = vector.broadcast %44 : vector<8x1xf32> to vector<8x128xf32>
    %47 = arith.mulf %45, %46 : vector<8x128xf32>
    %48 = arith.addf %38, %47 : vector<8x128xf32>
    %c1_i32 = arith.constant 1 : i32
    %49 = vector.broadcast %c1_i32 : i32 to vector<8x32xi32>
    %50 = arith.cmpi eq, %37, %49 : vector<8x32xi32>
    %cst_23 = arith.constant 0.000000e+00 : f32
    %51 = vector.broadcast %cst_23 : f32 to vector<8x32xf32>
    %52 = arith.select %50, %36, %51 : vector<8x32xi1>, vector<8x32xf32>
    %cst_24 = arith.constant dense<0.000000e+00> : vector<8xf32>
    %53 = vector.multi_reduction <add>, %52, %cst_24 [1] : vector<8x32xf32> to vector<8xf32>
    %54 = vector.shape_cast %53 : vector<8xf32> to vector<8x1xf32>
    %55 = vector.extract_strided_slice %34 {offsets = [0, 128], sizes = [8, 128], strides = [1, 1]} : vector<8x4096xf32> to vector<8x128xf32>
    %56 = vector.broadcast %54 : vector<8x1xf32> to vector<8x128xf32>
    %57 = arith.mulf %55, %56 : vector<8x128xf32>
    %58 = arith.addf %48, %57 : vector<8x128xf32>
    %c2_i32 = arith.constant 2 : i32
    %59 = vector.broadcast %c2_i32 : i32 to vector<8x32xi32>
    %60 = arith.cmpi eq, %37, %59 : vector<8x32xi32>
    %cst_25 = arith.constant 0.000000e+00 : f32
    %61 = vector.broadcast %cst_25 : f32 to vector<8x32xf32>
    %62 = arith.select %60, %36, %61 : vector<8x32xi1>, vector<8x32xf32>
    %cst_26 = arith.constant dense<0.000000e+00> : vector<8xf32>
    %63 = vector.multi_reduction <add>, %62, %cst_26 [1] : vector<8x32xf32> to vector<8xf32>
    %64 = vector.shape_cast %63 : vector<8xf32> to vector<8x1xf32>
    %65 = vector.extract_strided_slice %34 {offsets = [0, 256], sizes = [8, 128], strides = [1, 1]} : vector<8x4096xf32> to vector<8x128xf32>
    %66 = vector.broadcast %64 : vector<8x1xf32> to vector<8x128xf32>
    %67 = arith.mulf %65, %66 : vector<8x128xf32>
    %68 = arith.addf %58, %67 : vector<8x128xf32>
    %c3_i32 = arith.constant 3 : i32
    %69 = vector.broadcast %c3_i32 : i32 to vector<8x32xi32>
    %70 = arith.cmpi eq, %37, %69 : vector<8x32xi32>
    %cst_27 = arith.constant 0.000000e+00 : f32
    %71 = vector.broadcast %cst_27 : f32 to vector<8x32xf32>
    %72 = arith.select %70, %36, %71 : vector<8x32xi1>, vector<8x32xf32>
    %cst_28 = arith.constant dense<0.000000e+00> : vector<8xf32>
    %73 = vector.multi_reduction <add>, %72, %cst_28 [1] : vector<8x32xf32> to vector<8xf32>
    %74 = vector.shape_cast %73 : vector<8xf32> to vector<8x1xf32>
    %75 = vector.extract_strided_slice %34 {offsets = [0, 384], sizes = [8, 128], strides = [1, 1]} : vector<8x4096xf32> to vector<8x128xf32>
    %76 = vector.broadcast %74 : vector<8x1xf32> to vector<8x128xf32>
    %77 = arith.mulf %75, %76 : vector<8x128xf32>
    %78 = arith.addf %68, %77 : vector<8x128xf32>
    %c4_i32 = arith.constant 4 : i32
    %79 = vector.broadcast %c4_i32 : i32 to vector<8x32xi32>
    %80 = arith.cmpi eq, %37, %79 : vector<8x32xi32>
    %cst_29 = arith.constant 0.000000e+00 : f32
    %81 = vector.broadcast %cst_29 : f32 to vector<8x32xf32>
    %82 = arith.select %80, %36, %81 : vector<8x32xi1>, vector<8x32xf32>
    %cst_30 = arith.constant dense<0.000000e+00> : vector<8xf32>
    %83 = vector.multi_reduction <add>, %82, %cst_30 [1] : vector<8x32xf32> to vector<8xf32>
    %84 = vector.shape_cast %83 : vector<8xf32> to vector<8x1xf32>
    %85 = vector.extract_strided_slice %34 {offsets = [0, 512], sizes = [8, 128], strides = [1, 1]} : vector<8x4096xf32> to vector<8x128xf32>
    %86 = vector.broadcast %84 : vector<8x1xf32> to vector<8x128xf32>
    %87 = arith.mulf %85, %86 : vector<8x128xf32>
    %88 = arith.addf %78, %87 : vector<8x128xf32>
    %c5_i32 = arith.constant 5 : i32
    %89 = vector.broadcast %c5_i32 : i32 to vector<8x32xi32>
    %90 = arith.cmpi eq, %37, %89 : vector<8x32xi32>
    %cst_31 = arith.constant 0.000000e+00 : f32
    %91 = vector.broadcast %cst_31 : f32 to vector<8x32xf32>
    %92 = arith.select %90, %36, %91 : vector<8x32xi1>, vector<8x32xf32>
    %cst_32 = arith.constant dense<0.000000e+00> : vector<8xf32>
    %93 = vector.multi_reduction <add>, %92, %cst_32 [1] : vector<8x32xf32> to vector<8xf32>
    %94 = vector.shape_cast %93 : vector<8xf32> to vector<8x1xf32>
    %95 = vector.extract_strided_slice %34 {offsets = [0, 640], sizes = [8, 128], strides = [1, 1]} : vector<8x4096xf32> to vector<8x128xf32>
    %96 = vector.broadcast %94 : vector<8x1xf32> to vector<8x128xf32>
    %97 = arith.mulf %95, %96 : vector<8x128xf32>
    %98 = arith.addf %88, %97 : vector<8x128xf32>
    %c6_i32 = arith.constant 6 : i32
    %99 = vector.broadcast %c6_i32 : i32 to vector<8x32xi32>
    %100 = arith.cmpi eq, %37, %99 : vector<8x32xi32>
    %cst_33 = arith.constant 0.000000e+00 : f32
    %101 = vector.broadcast %cst_33 : f32 to vector<8x32xf32>
    %102 = arith.select %100, %36, %101 : vector<8x32xi1>, vector<8x32xf32>
    %cst_34 = arith.constant dense<0.000000e+00> : vector<8xf32>
    %103 = vector.multi_reduction <add>, %102, %cst_34 [1] : vector<8x32xf32> to vector<8xf32>
    %104 = vector.shape_cast %103 : vector<8xf32> to vector<8x1xf32>
    %105 = vector.extract_strided_slice %34 {offsets = [0, 768], sizes = [8, 128], strides = [1, 1]} : vector<8x4096xf32> to vector<8x128xf32>
    %106 = vector.broadcast %104 : vector<8x1xf32> to vector<8x128xf32>
    %107 = arith.mulf %105, %106 : vector<8x128xf32>
    %108 = arith.addf %98, %107 : vector<8x128xf32>
    %c7_i32 = arith.constant 7 : i32
    %109 = vector.broadcast %c7_i32 : i32 to vector<8x32xi32>
    %110 = arith.cmpi eq, %37, %109 : vector<8x32xi32>
    %cst_35 = arith.constant 0.000000e+00 : f32
    %111 = vector.broadcast %cst_35 : f32 to vector<8x32xf32>
    %112 = arith.select %110, %36, %111 : vector<8x32xi1>, vector<8x32xf32>
    %cst_36 = arith.constant dense<0.000000e+00> : vector<8xf32>
    %113 = vector.multi_reduction <add>, %112, %cst_36 [1] : vector<8x32xf32> to vector<8xf32>
    %114 = vector.shape_cast %113 : vector<8xf32> to vector<8x1xf32>
    %115 = vector.extract_strided_slice %34 {offsets = [0, 896], sizes = [8, 128], strides = [1, 1]} : vector<8x4096xf32> to vector<8x128xf32>
    %116 = vector.broadcast %114 : vector<8x1xf32> to vector<8x128xf32>
    %117 = arith.mulf %115, %116 : vector<8x128xf32>
    %118 = arith.addf %108, %117 : vector<8x128xf32>
    %c8_i32_37 = arith.constant 8 : i32
    %119 = vector.broadcast %c8_i32_37 : i32 to vector<8x32xi32>
    %120 = arith.cmpi eq, %37, %119 : vector<8x32xi32>
    %cst_38 = arith.constant 0.000000e+00 : f32
    %121 = vector.broadcast %cst_38 : f32 to vector<8x32xf32>
    %122 = arith.select %120, %36, %121 : vector<8x32xi1>, vector<8x32xf32>
    %cst_39 = arith.constant dense<0.000000e+00> : vector<8xf32>
    %123 = vector.multi_reduction <add>, %122, %cst_39 [1] : vector<8x32xf32> to vector<8xf32>
    %124 = vector.shape_cast %123 : vector<8xf32> to vector<8x1xf32>
    %125 = vector.extract_strided_slice %34 {offsets = [0, 1024], sizes = [8, 128], strides = [1, 1]} : vector<8x4096xf32> to vector<8x128xf32>
    %126 = vector.broadcast %124 : vector<8x1xf32> to vector<8x128xf32>
    %127 = arith.mulf %125, %126 : vector<8x128xf32>
    %128 = arith.addf %118, %127 : vector<8x128xf32>
    %c9_i32 = arith.constant 9 : i32
    %129 = vector.broadcast %c9_i32 : i32 to vector<8x32xi32>
    %130 = arith.cmpi eq, %37, %129 : vector<8x32xi32>
    %cst_40 = arith.constant 0.000000e+00 : f32
    %131 = vector.broadcast %cst_40 : f32 to vector<8x32xf32>
    %132 = arith.select %130, %36, %131 : vector<8x32xi1>, vector<8x32xf32>
    %cst_41 = arith.constant dense<0.000000e+00> : vector<8xf32>
    %133 = vector.multi_reduction <add>, %132, %cst_41 [1] : vector<8x32xf32> to vector<8xf32>
    %134 = vector.shape_cast %133 : vector<8xf32> to vector<8x1xf32>
    %135 = vector.extract_strided_slice %34 {offsets = [0, 1152], sizes = [8, 128], strides = [1, 1]} : vector<8x4096xf32> to vector<8x128xf32>
    %136 = vector.broadcast %134 : vector<8x1xf32> to vector<8x128xf32>
    %137 = arith.mulf %135, %136 : vector<8x128xf32>
    %138 = arith.addf %128, %137 : vector<8x128xf32>
    %c10_i32 = arith.constant 10 : i32
    %139 = vector.broadcast %c10_i32 : i32 to vector<8x32xi32>
    %140 = arith.cmpi eq, %37, %139 : vector<8x32xi32>
    %cst_42 = arith.constant 0.000000e+00 : f32
    %141 = vector.broadcast %cst_42 : f32 to vector<8x32xf32>
    %142 = arith.select %140, %36, %141 : vector<8x32xi1>, vector<8x32xf32>
    %cst_43 = arith.constant dense<0.000000e+00> : vector<8xf32>
    %143 = vector.multi_reduction <add>, %142, %cst_43 [1] : vector<8x32xf32> to vector<8xf32>
    %144 = vector.shape_cast %143 : vector<8xf32> to vector<8x1xf32>
    %145 = vector.extract_strided_slice %34 {offsets = [0, 1280], sizes = [8, 128], strides = [1, 1]} : vector<8x4096xf32> to vector<8x128xf32>
    %146 = vector.broadcast %144 : vector<8x1xf32> to vector<8x128xf32>
    %147 = arith.mulf %145, %146 : vector<8x128xf32>
    %148 = arith.addf %138, %147 : vector<8x128xf32>
    %c11_i32 = arith.constant 11 : i32
    %149 = vector.broadcast %c11_i32 : i32 to vector<8x32xi32>
    %150 = arith.cmpi eq, %37, %149 : vector<8x32xi32>
    %cst_44 = arith.constant 0.000000e+00 : f32
    %151 = vector.broadcast %cst_44 : f32 to vector<8x32xf32>
    %152 = arith.select %150, %36, %151 : vector<8x32xi1>, vector<8x32xf32>
    %cst_45 = arith.constant dense<0.000000e+00> : vector<8xf32>
    %153 = vector.multi_reduction <add>, %152, %cst_45 [1] : vector<8x32xf32> to vector<8xf32>
    %154 = vector.shape_cast %153 : vector<8xf32> to vector<8x1xf32>
    %155 = vector.extract_strided_slice %34 {offsets = [0, 1408], sizes = [8, 128], strides = [1, 1]} : vector<8x4096xf32> to vector<8x128xf32>
    %156 = vector.broadcast %154 : vector<8x1xf32> to vector<8x128xf32>
    %157 = arith.mulf %155, %156 : vector<8x128xf32>
    %158 = arith.addf %148, %157 : vector<8x128xf32>
    %c12_i32 = arith.constant 12 : i32
    %159 = vector.broadcast %c12_i32 : i32 to vector<8x32xi32>
    %160 = arith.cmpi eq, %37, %159 : vector<8x32xi32>
    %cst_46 = arith.constant 0.000000e+00 : f32
    %161 = vector.broadcast %cst_46 : f32 to vector<8x32xf32>
    %162 = arith.select %160, %36, %161 : vector<8x32xi1>, vector<8x32xf32>
    %cst_47 = arith.constant dense<0.000000e+00> : vector<8xf32>
    %163 = vector.multi_reduction <add>, %162, %cst_47 [1] : vector<8x32xf32> to vector<8xf32>
    %164 = vector.shape_cast %163 : vector<8xf32> to vector<8x1xf32>
    %165 = vector.extract_strided_slice %34 {offsets = [0, 1536], sizes = [8, 128], strides = [1, 1]} : vector<8x4096xf32> to vector<8x128xf32>
    %166 = vector.broadcast %164 : vector<8x1xf32> to vector<8x128xf32>
    %167 = arith.mulf %165, %166 : vector<8x128xf32>
    %168 = arith.addf %158, %167 : vector<8x128xf32>
    %c13_i32 = arith.constant 13 : i32
    %169 = vector.broadcast %c13_i32 : i32 to vector<8x32xi32>
    %170 = arith.cmpi eq, %37, %169 : vector<8x32xi32>
    %cst_48 = arith.constant 0.000000e+00 : f32
    %171 = vector.broadcast %cst_48 : f32 to vector<8x32xf32>
    %172 = arith.select %170, %36, %171 : vector<8x32xi1>, vector<8x32xf32>
    %cst_49 = arith.constant dense<0.000000e+00> : vector<8xf32>
    %173 = vector.multi_reduction <add>, %172, %cst_49 [1] : vector<8x32xf32> to vector<8xf32>
    %174 = vector.shape_cast %173 : vector<8xf32> to vector<8x1xf32>
    %175 = vector.extract_strided_slice %34 {offsets = [0, 1664], sizes = [8, 128], strides = [1, 1]} : vector<8x4096xf32> to vector<8x128xf32>
    %176 = vector.broadcast %174 : vector<8x1xf32> to vector<8x128xf32>
    %177 = arith.mulf %175, %176 : vector<8x128xf32>
    %178 = arith.addf %168, %177 : vector<8x128xf32>
    %c14_i32 = arith.constant 14 : i32
    %179 = vector.broadcast %c14_i32 : i32 to vector<8x32xi32>
    %180 = arith.cmpi eq, %37, %179 : vector<8x32xi32>
    %cst_50 = arith.constant 0.000000e+00 : f32
    %181 = vector.broadcast %cst_50 : f32 to vector<8x32xf32>
    %182 = arith.select %180, %36, %181 : vector<8x32xi1>, vector<8x32xf32>
    %cst_51 = arith.constant dense<0.000000e+00> : vector<8xf32>
    %183 = vector.multi_reduction <add>, %182, %cst_51 [1] : vector<8x32xf32> to vector<8xf32>
    %184 = vector.shape_cast %183 : vector<8xf32> to vector<8x1xf32>
    %185 = vector.extract_strided_slice %34 {offsets = [0, 1792], sizes = [8, 128], strides = [1, 1]} : vector<8x4096xf32> to vector<8x128xf32>
    %186 = vector.broadcast %184 : vector<8x1xf32> to vector<8x128xf32>
    %187 = arith.mulf %185, %186 : vector<8x128xf32>
    %188 = arith.addf %178, %187 : vector<8x128xf32>
    %c15_i32 = arith.constant 15 : i32
    %189 = vector.broadcast %c15_i32 : i32 to vector<8x32xi32>
    %190 = arith.cmpi eq, %37, %189 : vector<8x32xi32>
    %cst_52 = arith.constant 0.000000e+00 : f32
    %191 = vector.broadcast %cst_52 : f32 to vector<8x32xf32>
    %192 = arith.select %190, %36, %191 : vector<8x32xi1>, vector<8x32xf32>
    %cst_53 = arith.constant dense<0.000000e+00> : vector<8xf32>
    %193 = vector.multi_reduction <add>, %192, %cst_53 [1] : vector<8x32xf32> to vector<8xf32>
    %194 = vector.shape_cast %193 : vector<8xf32> to vector<8x1xf32>
    %195 = vector.extract_strided_slice %34 {offsets = [0, 1920], sizes = [8, 128], strides = [1, 1]} : vector<8x4096xf32> to vector<8x128xf32>
    %196 = vector.broadcast %194 : vector<8x1xf32> to vector<8x128xf32>
    %197 = arith.mulf %195, %196 : vector<8x128xf32>
    %198 = arith.addf %188, %197 : vector<8x128xf32>
    %c16_i32 = arith.constant 16 : i32
    %199 = vector.broadcast %c16_i32 : i32 to vector<8x32xi32>
    %200 = arith.cmpi eq, %37, %199 : vector<8x32xi32>
    %cst_54 = arith.constant 0.000000e+00 : f32
    %201 = vector.broadcast %cst_54 : f32 to vector<8x32xf32>
    %202 = arith.select %200, %36, %201 : vector<8x32xi1>, vector<8x32xf32>
    %cst_55 = arith.constant dense<0.000000e+00> : vector<8xf32>
    %203 = vector.multi_reduction <add>, %202, %cst_55 [1] : vector<8x32xf32> to vector<8xf32>
    %204 = vector.shape_cast %203 : vector<8xf32> to vector<8x1xf32>
    %205 = vector.extract_strided_slice %34 {offsets = [0, 2048], sizes = [8, 128], strides = [1, 1]} : vector<8x4096xf32> to vector<8x128xf32>
    %206 = vector.broadcast %204 : vector<8x1xf32> to vector<8x128xf32>
    %207 = arith.mulf %205, %206 : vector<8x128xf32>
    %208 = arith.addf %198, %207 : vector<8x128xf32>
    %c17_i32 = arith.constant 17 : i32
    %209 = vector.broadcast %c17_i32 : i32 to vector<8x32xi32>
    %210 = arith.cmpi eq, %37, %209 : vector<8x32xi32>
    %cst_56 = arith.constant 0.000000e+00 : f32
    %211 = vector.broadcast %cst_56 : f32 to vector<8x32xf32>
    %212 = arith.select %210, %36, %211 : vector<8x32xi1>, vector<8x32xf32>
    %cst_57 = arith.constant dense<0.000000e+00> : vector<8xf32>
    %213 = vector.multi_reduction <add>, %212, %cst_57 [1] : vector<8x32xf32> to vector<8xf32>
    %214 = vector.shape_cast %213 : vector<8xf32> to vector<8x1xf32>
    %215 = vector.extract_strided_slice %34 {offsets = [0, 2176], sizes = [8, 128], strides = [1, 1]} : vector<8x4096xf32> to vector<8x128xf32>
    %216 = vector.broadcast %214 : vector<8x1xf32> to vector<8x128xf32>
    %217 = arith.mulf %215, %216 : vector<8x128xf32>
    %218 = arith.addf %208, %217 : vector<8x128xf32>
    %c18_i32 = arith.constant 18 : i32
    %219 = vector.broadcast %c18_i32 : i32 to vector<8x32xi32>
    %220 = arith.cmpi eq, %37, %219 : vector<8x32xi32>
    %cst_58 = arith.constant 0.000000e+00 : f32
    %221 = vector.broadcast %cst_58 : f32 to vector<8x32xf32>
    %222 = arith.select %220, %36, %221 : vector<8x32xi1>, vector<8x32xf32>
    %cst_59 = arith.constant dense<0.000000e+00> : vector<8xf32>
    %223 = vector.multi_reduction <add>, %222, %cst_59 [1] : vector<8x32xf32> to vector<8xf32>
    %224 = vector.shape_cast %223 : vector<8xf32> to vector<8x1xf32>
    %225 = vector.extract_strided_slice %34 {offsets = [0, 2304], sizes = [8, 128], strides = [1, 1]} : vector<8x4096xf32> to vector<8x128xf32>
    %226 = vector.broadcast %224 : vector<8x1xf32> to vector<8x128xf32>
    %227 = arith.mulf %225, %226 : vector<8x128xf32>
    %228 = arith.addf %218, %227 : vector<8x128xf32>
    %c19_i32 = arith.constant 19 : i32
    %229 = vector.broadcast %c19_i32 : i32 to vector<8x32xi32>
    %230 = arith.cmpi eq, %37, %229 : vector<8x32xi32>
    %cst_60 = arith.constant 0.000000e+00 : f32
    %231 = vector.broadcast %cst_60 : f32 to vector<8x32xf32>
    %232 = arith.select %230, %36, %231 : vector<8x32xi1>, vector<8x32xf32>
    %cst_61 = arith.constant dense<0.000000e+00> : vector<8xf32>
    %233 = vector.multi_reduction <add>, %232, %cst_61 [1] : vector<8x32xf32> to vector<8xf32>
    %234 = vector.shape_cast %233 : vector<8xf32> to vector<8x1xf32>
    %235 = vector.extract_strided_slice %34 {offsets = [0, 2432], sizes = [8, 128], strides = [1, 1]} : vector<8x4096xf32> to vector<8x128xf32>
    %236 = vector.broadcast %234 : vector<8x1xf32> to vector<8x128xf32>
    %237 = arith.mulf %235, %236 : vector<8x128xf32>
    %238 = arith.addf %228, %237 : vector<8x128xf32>
    %c20_i32 = arith.constant 20 : i32
    %239 = vector.broadcast %c20_i32 : i32 to vector<8x32xi32>
    %240 = arith.cmpi eq, %37, %239 : vector<8x32xi32>
    %cst_62 = arith.constant 0.000000e+00 : f32
    %241 = vector.broadcast %cst_62 : f32 to vector<8x32xf32>
    %242 = arith.select %240, %36, %241 : vector<8x32xi1>, vector<8x32xf32>
    %cst_63 = arith.constant dense<0.000000e+00> : vector<8xf32>
    %243 = vector.multi_reduction <add>, %242, %cst_63 [1] : vector<8x32xf32> to vector<8xf32>
    %244 = vector.shape_cast %243 : vector<8xf32> to vector<8x1xf32>
    %245 = vector.extract_strided_slice %34 {offsets = [0, 2560], sizes = [8, 128], strides = [1, 1]} : vector<8x4096xf32> to vector<8x128xf32>
    %246 = vector.broadcast %244 : vector<8x1xf32> to vector<8x128xf32>
    %247 = arith.mulf %245, %246 : vector<8x128xf32>
    %248 = arith.addf %238, %247 : vector<8x128xf32>
    %c21_i32 = arith.constant 21 : i32
    %249 = vector.broadcast %c21_i32 : i32 to vector<8x32xi32>
    %250 = arith.cmpi eq, %37, %249 : vector<8x32xi32>
    %cst_64 = arith.constant 0.000000e+00 : f32
    %251 = vector.broadcast %cst_64 : f32 to vector<8x32xf32>
    %252 = arith.select %250, %36, %251 : vector<8x32xi1>, vector<8x32xf32>
    %cst_65 = arith.constant dense<0.000000e+00> : vector<8xf32>
    %253 = vector.multi_reduction <add>, %252, %cst_65 [1] : vector<8x32xf32> to vector<8xf32>
    %254 = vector.shape_cast %253 : vector<8xf32> to vector<8x1xf32>
    %255 = vector.extract_strided_slice %34 {offsets = [0, 2688], sizes = [8, 128], strides = [1, 1]} : vector<8x4096xf32> to vector<8x128xf32>
    %256 = vector.broadcast %254 : vector<8x1xf32> to vector<8x128xf32>
    %257 = arith.mulf %255, %256 : vector<8x128xf32>
    %258 = arith.addf %248, %257 : vector<8x128xf32>
    %c22_i32 = arith.constant 22 : i32
    %259 = vector.broadcast %c22_i32 : i32 to vector<8x32xi32>
    %260 = arith.cmpi eq, %37, %259 : vector<8x32xi32>
    %cst_66 = arith.constant 0.000000e+00 : f32
    %261 = vector.broadcast %cst_66 : f32 to vector<8x32xf32>
    %262 = arith.select %260, %36, %261 : vector<8x32xi1>, vector<8x32xf32>
    %cst_67 = arith.constant dense<0.000000e+00> : vector<8xf32>
    %263 = vector.multi_reduction <add>, %262, %cst_67 [1] : vector<8x32xf32> to vector<8xf32>
    %264 = vector.shape_cast %263 : vector<8xf32> to vector<8x1xf32>
    %265 = vector.extract_strided_slice %34 {offsets = [0, 2816], sizes = [8, 128], strides = [1, 1]} : vector<8x4096xf32> to vector<8x128xf32>
    %266 = vector.broadcast %264 : vector<8x1xf32> to vector<8x128xf32>
    %267 = arith.mulf %265, %266 : vector<8x128xf32>
    %268 = arith.addf %258, %267 : vector<8x128xf32>
    %c23_i32 = arith.constant 23 : i32
    %269 = vector.broadcast %c23_i32 : i32 to vector<8x32xi32>
    %270 = arith.cmpi eq, %37, %269 : vector<8x32xi32>
    %cst_68 = arith.constant 0.000000e+00 : f32
    %271 = vector.broadcast %cst_68 : f32 to vector<8x32xf32>
    %272 = arith.select %270, %36, %271 : vector<8x32xi1>, vector<8x32xf32>
    %cst_69 = arith.constant dense<0.000000e+00> : vector<8xf32>
    %273 = vector.multi_reduction <add>, %272, %cst_69 [1] : vector<8x32xf32> to vector<8xf32>
    %274 = vector.shape_cast %273 : vector<8xf32> to vector<8x1xf32>
    %275 = vector.extract_strided_slice %34 {offsets = [0, 2944], sizes = [8, 128], strides = [1, 1]} : vector<8x4096xf32> to vector<8x128xf32>
    %276 = vector.broadcast %274 : vector<8x1xf32> to vector<8x128xf32>
    %277 = arith.mulf %275, %276 : vector<8x128xf32>
    %278 = arith.addf %268, %277 : vector<8x128xf32>
    %c24_i32 = arith.constant 24 : i32
    %279 = vector.broadcast %c24_i32 : i32 to vector<8x32xi32>
    %280 = arith.cmpi eq, %37, %279 : vector<8x32xi32>
    %cst_70 = arith.constant 0.000000e+00 : f32
    %281 = vector.broadcast %cst_70 : f32 to vector<8x32xf32>
    %282 = arith.select %280, %36, %281 : vector<8x32xi1>, vector<8x32xf32>
    %cst_71 = arith.constant dense<0.000000e+00> : vector<8xf32>
    %283 = vector.multi_reduction <add>, %282, %cst_71 [1] : vector<8x32xf32> to vector<8xf32>
    %284 = vector.shape_cast %283 : vector<8xf32> to vector<8x1xf32>
    %285 = vector.extract_strided_slice %34 {offsets = [0, 3072], sizes = [8, 128], strides = [1, 1]} : vector<8x4096xf32> to vector<8x128xf32>
    %286 = vector.broadcast %284 : vector<8x1xf32> to vector<8x128xf32>
    %287 = arith.mulf %285, %286 : vector<8x128xf32>
    %288 = arith.addf %278, %287 : vector<8x128xf32>
    %c25_i32 = arith.constant 25 : i32
    %289 = vector.broadcast %c25_i32 : i32 to vector<8x32xi32>
    %290 = arith.cmpi eq, %37, %289 : vector<8x32xi32>
    %cst_72 = arith.constant 0.000000e+00 : f32
    %291 = vector.broadcast %cst_72 : f32 to vector<8x32xf32>
    %292 = arith.select %290, %36, %291 : vector<8x32xi1>, vector<8x32xf32>
    %cst_73 = arith.constant dense<0.000000e+00> : vector<8xf32>
    %293 = vector.multi_reduction <add>, %292, %cst_73 [1] : vector<8x32xf32> to vector<8xf32>
    %294 = vector.shape_cast %293 : vector<8xf32> to vector<8x1xf32>
    %295 = vector.extract_strided_slice %34 {offsets = [0, 3200], sizes = [8, 128], strides = [1, 1]} : vector<8x4096xf32> to vector<8x128xf32>
    %296 = vector.broadcast %294 : vector<8x1xf32> to vector<8x128xf32>
    %297 = arith.mulf %295, %296 : vector<8x128xf32>
    %298 = arith.addf %288, %297 : vector<8x128xf32>
    %c26_i32 = arith.constant 26 : i32
    %299 = vector.broadcast %c26_i32 : i32 to vector<8x32xi32>
    %300 = arith.cmpi eq, %37, %299 : vector<8x32xi32>
    %cst_74 = arith.constant 0.000000e+00 : f32
    %301 = vector.broadcast %cst_74 : f32 to vector<8x32xf32>
    %302 = arith.select %300, %36, %301 : vector<8x32xi1>, vector<8x32xf32>
    %cst_75 = arith.constant dense<0.000000e+00> : vector<8xf32>
    %303 = vector.multi_reduction <add>, %302, %cst_75 [1] : vector<8x32xf32> to vector<8xf32>
    %304 = vector.shape_cast %303 : vector<8xf32> to vector<8x1xf32>
    %305 = vector.extract_strided_slice %34 {offsets = [0, 3328], sizes = [8, 128], strides = [1, 1]} : vector<8x4096xf32> to vector<8x128xf32>
    %306 = vector.broadcast %304 : vector<8x1xf32> to vector<8x128xf32>
    %307 = arith.mulf %305, %306 : vector<8x128xf32>
    %308 = arith.addf %298, %307 : vector<8x128xf32>
    %c27_i32 = arith.constant 27 : i32
    %309 = vector.broadcast %c27_i32 : i32 to vector<8x32xi32>
    %310 = arith.cmpi eq, %37, %309 : vector<8x32xi32>
    %cst_76 = arith.constant 0.000000e+00 : f32
    %311 = vector.broadcast %cst_76 : f32 to vector<8x32xf32>
    %312 = arith.select %310, %36, %311 : vector<8x32xi1>, vector<8x32xf32>
    %cst_77 = arith.constant dense<0.000000e+00> : vector<8xf32>
    %313 = vector.multi_reduction <add>, %312, %cst_77 [1] : vector<8x32xf32> to vector<8xf32>
    %314 = vector.shape_cast %313 : vector<8xf32> to vector<8x1xf32>
    %315 = vector.extract_strided_slice %34 {offsets = [0, 3456], sizes = [8, 128], strides = [1, 1]} : vector<8x4096xf32> to vector<8x128xf32>
    %316 = vector.broadcast %314 : vector<8x1xf32> to vector<8x128xf32>
    %317 = arith.mulf %315, %316 : vector<8x128xf32>
    %318 = arith.addf %308, %317 : vector<8x128xf32>
    %c28_i32 = arith.constant 28 : i32
    %319 = vector.broadcast %c28_i32 : i32 to vector<8x32xi32>
    %320 = arith.cmpi eq, %37, %319 : vector<8x32xi32>
    %cst_78 = arith.constant 0.000000e+00 : f32
    %321 = vector.broadcast %cst_78 : f32 to vector<8x32xf32>
    %322 = arith.select %320, %36, %321 : vector<8x32xi1>, vector<8x32xf32>
    %cst_79 = arith.constant dense<0.000000e+00> : vector<8xf32>
    %323 = vector.multi_reduction <add>, %322, %cst_79 [1] : vector<8x32xf32> to vector<8xf32>
    %324 = vector.shape_cast %323 : vector<8xf32> to vector<8x1xf32>
    %325 = vector.extract_strided_slice %34 {offsets = [0, 3584], sizes = [8, 128], strides = [1, 1]} : vector<8x4096xf32> to vector<8x128xf32>
    %326 = vector.broadcast %324 : vector<8x1xf32> to vector<8x128xf32>
    %327 = arith.mulf %325, %326 : vector<8x128xf32>
    %328 = arith.addf %318, %327 : vector<8x128xf32>
    %c29_i32 = arith.constant 29 : i32
    %329 = vector.broadcast %c29_i32 : i32 to vector<8x32xi32>
    %330 = arith.cmpi eq, %37, %329 : vector<8x32xi32>
    %cst_80 = arith.constant 0.000000e+00 : f32
    %331 = vector.broadcast %cst_80 : f32 to vector<8x32xf32>
    %332 = arith.select %330, %36, %331 : vector<8x32xi1>, vector<8x32xf32>
    %cst_81 = arith.constant dense<0.000000e+00> : vector<8xf32>
    %333 = vector.multi_reduction <add>, %332, %cst_81 [1] : vector<8x32xf32> to vector<8xf32>
    %334 = vector.shape_cast %333 : vector<8xf32> to vector<8x1xf32>
    %335 = vector.extract_strided_slice %34 {offsets = [0, 3712], sizes = [8, 128], strides = [1, 1]} : vector<8x4096xf32> to vector<8x128xf32>
    %336 = vector.broadcast %334 : vector<8x1xf32> to vector<8x128xf32>
    %337 = arith.mulf %335, %336 : vector<8x128xf32>
    %338 = arith.addf %328, %337 : vector<8x128xf32>
    %c30_i32 = arith.constant 30 : i32
    %339 = vector.broadcast %c30_i32 : i32 to vector<8x32xi32>
    %340 = arith.cmpi eq, %37, %339 : vector<8x32xi32>
    %cst_82 = arith.constant 0.000000e+00 : f32
    %341 = vector.broadcast %cst_82 : f32 to vector<8x32xf32>
    %342 = arith.select %340, %36, %341 : vector<8x32xi1>, vector<8x32xf32>
    %cst_83 = arith.constant dense<0.000000e+00> : vector<8xf32>
    %343 = vector.multi_reduction <add>, %342, %cst_83 [1] : vector<8x32xf32> to vector<8xf32>
    %344 = vector.shape_cast %343 : vector<8xf32> to vector<8x1xf32>
    %345 = vector.extract_strided_slice %34 {offsets = [0, 3840], sizes = [8, 128], strides = [1, 1]} : vector<8x4096xf32> to vector<8x128xf32>
    %346 = vector.broadcast %344 : vector<8x1xf32> to vector<8x128xf32>
    %347 = arith.mulf %345, %346 : vector<8x128xf32>
    %348 = arith.addf %338, %347 : vector<8x128xf32>
    %c31_i32 = arith.constant 31 : i32
    %349 = vector.broadcast %c31_i32 : i32 to vector<8x32xi32>
    %350 = arith.cmpi eq, %37, %349 : vector<8x32xi32>
    %cst_84 = arith.constant 0.000000e+00 : f32
    %351 = vector.broadcast %cst_84 : f32 to vector<8x32xf32>
    %352 = arith.select %350, %36, %351 : vector<8x32xi1>, vector<8x32xf32>
    %cst_85 = arith.constant dense<0.000000e+00> : vector<8xf32>
    %353 = vector.multi_reduction <add>, %352, %cst_85 [1] : vector<8x32xf32> to vector<8xf32>
    %354 = vector.shape_cast %353 : vector<8xf32> to vector<8x1xf32>
    %355 = vector.extract_strided_slice %34 {offsets = [0, 3968], sizes = [8, 128], strides = [1, 1]} : vector<8x4096xf32> to vector<8x128xf32>
    %356 = vector.broadcast %354 : vector<8x1xf32> to vector<8x128xf32>
    %357 = arith.mulf %355, %356 : vector<8x128xf32>
    %358 = arith.addf %348, %357 : vector<8x128xf32>
    %c0_86 = arith.constant 0 : index
    %c0_87 = arith.constant 0 : index
    %359 = vector.load %arg7[%c0_86, %c0_87] : memref<1x128xf32, #tpu.memory_space<vmem>>, vector<1x128xf32>
    %360 = vector.broadcast %359 : vector<1x128xf32> to vector<8x128xf32>
    %361 = arith.addf %358, %360 : vector<8x128xf32>
    %362 = tpu.iota {dimensions = array<i32: 1>} : vector<8x128xi32>
    %cst_88 = arith.constant dense<0xFF800000> : vector<8xf32>
    %363 = vector.multi_reduction <maximumf>, %361, %cst_88 [1] : vector<8x128xf32> to vector<8xf32>
    %364 = vector.shape_cast %363 : vector<8xf32> to vector<8x1xf32>
    %365 = vector.broadcast %364 : vector<8x1xf32> to vector<8x128xf32>
    %366 = arith.cmpf oeq, %361, %365 : vector<8x128xf32>
    %c128_i32 = arith.constant 128 : i32
    %367 = vector.broadcast %c128_i32 : i32 to vector<8x128xi32>
    %368 = arith.select %366, %362, %367 : vector<8x128xi1>, vector<8x128xi32>
    %cst_89 = arith.constant dense<2147483647> : vector<8xi32>
    %369 = vector.multi_reduction <minsi>, %368, %cst_89 [1] : vector<8x128xi32> to vector<8xi32>
    %370 = vector.shape_cast %369 : vector<8xi32> to vector<8x1xi32>
    %371 = tpu.iota {dimensions = array<i32: 0>} : vector<8x8xi32>
    %372 = tpu.iota {dimensions = array<i32: 1>} : vector<8x8xi32>
    %373 = arith.cmpi eq, %371, %372 : vector<8x8xi32>
    %374 = arith.sitofp %25 : vector<8x1xi32> to vector<8x1xf32>
    %cst_90 = arith.constant 0.000000e+00 : f32
    %375 = vector.shape_cast %374 : vector<8x1xf32> to vector<8x1xf32>
    %376 = vector.broadcast %375 : vector<8x1xf32> to vector<8x8xf32>
    %377 = vector.broadcast %cst_90 : f32 to vector<8x8xf32>
    %378 = arith.select %373, %376, %377 : vector<8x8xi1>, vector<8x8xf32>
    %cst_91 = arith.constant dense<0.000000e+00> : vector<8xf32>
    %379 = vector.multi_reduction <add>, %378, %cst_91 [0] : vector<8x8xf32> to vector<8xf32>
    %380 = vector.shape_cast %379 : vector<8xf32> to vector<1x8xf32>
    %381 = arith.sitofp %370 : vector<8x1xi32> to vector<8x1xf32>
    %cst_92 = arith.constant 0.000000e+00 : f32
    %382 = vector.shape_cast %381 : vector<8x1xf32> to vector<8x1xf32>
    %383 = vector.broadcast %382 : vector<8x1xf32> to vector<8x8xf32>
    %384 = vector.broadcast %cst_92 : f32 to vector<8x8xf32>
    %385 = arith.select %373, %383, %384 : vector<8x8xi1>, vector<8x8xf32>
    %cst_93 = arith.constant dense<0.000000e+00> : vector<8xf32>
    %386 = vector.multi_reduction <add>, %385, %cst_93 [0] : vector<8x8xf32> to vector<8xf32>
    %387 = vector.shape_cast %386 : vector<8xf32> to vector<1x8xf32>
    %388 = arith.fptosi %380 : vector<1x8xf32> to vector<1x8xi32>
    %c0_94 = arith.constant 0 : index
    %c0_95 = arith.constant 0 : index
    %c0_96 = arith.constant 0 : index
    %389 = vector.load %arg8[%c0_94, %c0_95, %c0_96] : memref<1x1x8xi32, #tpu.memory_space<vmem>>, vector<1x1x8xi32>
    %390 = vector.shape_cast %389 : vector<1x1x8xi32> to vector<1x8xi32>
    %391 = vector.shape_cast %388 : vector<1x8xi32> to vector<1x1x8xi32>
    tpu.vector_store %arg8[%c0_94, %c0_95, %c0_96], %391 {strides = array<i32>} : memref<1x1x8xi32, #tpu.memory_space<vmem>>, vector<1x1x8xi32>,
    %392 = arith.fptosi %387 : vector<1x8xf32> to vector<1x8xi32>
    %c0_97 = arith.constant 0 : index
    %c0_98 = arith.constant 0 : index
    %c0_99 = arith.constant 0 : index
    %393 = vector.load %arg9[%c0_97, %c0_98, %c0_99] : memref<1x1x8xi32, #tpu.memory_space<vmem>>, vector<1x1x8xi32>
    %394 = vector.shape_cast %393 : vector<1x1x8xi32> to vector<1x8xi32>
    %395 = vector.shape_cast %392 : vector<1x8xi32> to vector<1x1x8xi32>
    tpu.vector_store %arg9[%c0_97, %c0_98, %c0_99], %395 {strides = array<i32>} : memref<1x1x8xi32, #tpu.memory_space<vmem>>, vector<1x1x8xi32>,
    return
  }
  func.func @transform_0(%arg0: i32, %arg1: i32) -> (i32, i32, i32) {
    %c0_i32 = arith.constant 0 : i32
    %c0_i32_0 = arith.constant 0 : i32
    return %arg0, %arg1, %c0_i32 : i32, i32, i32
  }
  func.func @transform_1(%arg0: i32, %arg1: i32) -> (i32, i32, i32) {
    %c0_i32 = arith.constant 0 : i32
    %c0_i32_0 = arith.constant 0 : i32
    return %arg0, %arg1, %c0_i32 : i32, i32, i32
  }
  func.func @transform_2(%arg0: i32, %arg1: i32) -> (i32, i32, i32) {
    %c0_i32 = arith.constant 0 : i32
    %c0_i32_0 = arith.constant 0 : i32
    %c0_i32_1 = arith.constant 0 : i32
    return %arg0, %c0_i32, %c0_i32_0 : i32, i32, i32
  }
  func.func @transform_3(%arg0: i32, %arg1: i32) -> (i32, i32, i32) {
    %c0_i32 = arith.constant 0 : i32
    %c0_i32_0 = arith.constant 0 : i32
    return %arg0, %arg1, %c0_i32 : i32, i32, i32
  }
  func.func @transform_4(%arg0: i32, %arg1: i32) -> (i32, i32) {
    %c0_i32 = arith.constant 0 : i32
    %c0_i32_0 = arith.constant 0 : i32
    %c0_i32_1 = arith.constant 0 : i32
    return %c0_i32, %c0_i32_0 : i32, i32
  }
  func.func @transform_5(%arg0: i32, %arg1: i32) -> (i32, i32) {
    %c0_i32 = arith.constant 0 : i32
    %c0_i32_0 = arith.constant 0 : i32
    %c0_i32_1 = arith.constant 0 : i32
    return %c0_i32, %c0_i32_0 : i32, i32
  }
  func.func @transform_6(%arg0: i32, %arg1: i32) -> (i32, i32, i32) {
    %c0_i32 = arith.constant 0 : i32
    %c0_i32_0 = arith.constant 0 : i32
    return %arg0, %c0_i32, %arg1 : i32, i32, i32
  }
  func.func @transform_7(%arg0: i32, %arg1: i32) -> (i32, i32, i32) {
    %c0_i32 = arith.constant 0 : i32
    %c0_i32_0 = arith.constant 0 : i32
    return %arg0, %c0_i32, %arg1 : i32, i32, i32
  }
}

</mosaic_0001>

<llo_original>
// kernel: greedy_decoding_pallas.1
$region0: #{greedy_decoding_pallas.1}
  #allocation0 [shape = 'u32[]', space=smem, size = 0x4, offset = 0x4, fixed_abs, tag = 'smem constant byte address 0x4 - core index']
  #allocation1 [shape = 'u32[72,128]{1,0:T(1,128)}', space=vmem, size = 0x9000, scoped, tag = 'internal scratch']
  %s0 = inlined_call_operand.vmem [shape: f32[2,8,8], index: 0, kind: input, shape index: {}]
  %s1 = inlined_call_operand.vmem [shape: s32[2,8,1], index: 1, kind: input, shape index: {}]
  %s2 = inlined_call_operand.vmem [shape: f32[2,8,32], index: 2, kind: input, shape index: {}]
  %s3 = inlined_call_operand.vmem [shape: f32[2,8,32], index: 3, kind: input, shape index: {}]
  %s4 = inlined_call_operand.vmem [shape: f32[32,4096], index: 4, kind: input, shape index: {}]
  %s5 = inlined_call_operand.vmem [shape: f32[1,128], index: 5, kind: input, shape index: {}]
  %s6 = inlined_call_operand.hbm [shape: s32[2,1,8], index: 6, kind: output, shape index: {0}]
  %s7 = inlined_call_operand.hbm [shape: s32[2,1,8], index: 7, kind: output, shape index: {1}]
  %8 = xla_tuple %s6, %s7
  %s9 = sld [smem:[#allocation0]]
  $region65: #{greedy_decoding_pallas.1} parent=0
    _
  %s11 = ssub.s32 1, %s9
  %s12 = scalar_select 0, %s11, %s9
  $region1: #{greedy_decoding_pallas.1} parent=0
    #allocation2 [shape = 'u8[1024]{0}', space=vmem, size = 0x400, scoped, tag = 'output window, operand 0']
    #allocation3 [shape = 's32[2]{0}', space=sflag, size = 0x8, scoped, tag = 'scoped memory for greedy_decoding_pallas.1']
    #allocation4 [shape = 'u8[1024]{0}', space=vmem, size = 0x400, scoped, tag = 'output window, operand 1']
    #allocation5 [shape = 's32[2]{0}', space=sflag, size = 0x8, scoped, tag = 'scoped memory for greedy_decoding_pallas.1']
    %13 = vsyncpa [#allocation3], 0
    %s14 = scalar_lea.sflag [#allocation3], 1
    %15 = vsyncpa %s14, 0
    %16 = vsyncpa [#allocation5], 0
    %s17 = scalar_lea.sflag [#allocation5], 1
    %18 = vsyncpa %s17, 0
    loop: start=0, step=1, limit=4
    $region2: #{greedy_decoding_pallas.1} parent=1 // loop_pre_header
      _
    $region3: #{greedy_decoding_pallas.1} parent=1 // loop_header
      %s20 = sphi 0, %s24
      %p21 = scmp.ge.s32.totalorder %s20, 4
      %s27 = sphi 0, %s39
      %s28 = sphi 0, %s35
      %s29 = sphi 0, %s27
      %s30 = sphi 0, %s28
      %s31 = sphi 0, %s29
      %s32 = sphi 0, %s30
      %s44 = sphi 0, %s46
      %s47 = sphi 0, %s44
      %s48 = sphi 0, %s47
      %s64 = sphi 0, %s48
      %s72 = sphi 0, %s74
      %s75 = sphi 0, %s72
      %s76 = sphi 0, %s75
      %s92 = sphi 0, %s76
      %s98 = sphi 0, %s100
      %s101 = sphi 0, %s98
      %s102 = sphi 0, %s101
      %s118 = sphi 0, %s102
      %s126 = sphi 0, %s128
      %s129 = sphi 0, %s126
      %s130 = sphi 0, %s129
      %s146 = sphi 0, %s130
      %s150 = sphi 0, %s150
      %s152 = sphi 0, %s150
      %s153 = sphi 0, %s152
      %s167 = sphi 0, %s153
      %s171 = sphi 0, %s171
      %s173 = sphi 0, %s171
      %s174 = sphi 0, %s173
      %s188 = sphi 0, %s174
      %s196 = sphi 0, %s198
      %s199 = sphi 0, %s196
      %s200 = sphi 0, %s199
      %s216 = sphi 0, %s200
      %s224 = sphi 0, %s226
      %s227 = sphi 0, %s224
      %s228 = sphi 0, %s227
      %s244 = sphi 0, %s228
    $region4: #{greedy_decoding_pallas.1} parent=1 // loop_header_branch
      %23 = sbr.rel (%p21) target = $region8
    $region5: #{greedy_decoding_pallas.1} parent=1 // loop_body
      %s25 = ssub.s32 %s20, 1
      %s26 = ssub.s32 %s20, 2
      %s33 = sadd.s32 1, %s28
      %p34 = scmp.ge.s32.totalorder %s33, 1
      %s35 = scalar_select %p34, 0, %s33
      %s36 = sadd.s32 1, %s27
      %s37 = scalar_select %p34, %s36, %s27
      %p38 = scmp.ge.s32.totalorder %s37, 2
      %s39 = scalar_select %p38, 0, %s37
      %s40 = ssub.s32 %s27, %s39
      %s41 = ssub.s32 %s28, %s35
      %s42 = sor.u32 %s40, %s41
      %p43 = scmp.eq.s32.totalorder %s42, 0
      %s45 = sadd.s32 %s44, 1
      %s46 = scalar_select %p43, %s44, %s45
      %p49 = pneg %p43
      %p50 = scmp.eq.s32.totalorder %s20, 1
      %p51 = por %p49, %p50
      %p52 = scmp.ne.s32.totalorder %s44, %s47
      %p53 = scmp.eq.s32.totalorder %s20, 0
      %p54 = por %p52, %p53
      %p55 = scmp.ne.s32.totalorder %s44, %s47
      %p56 = scmp.eq.s32.totalorder %s25, 1
      %p57 = por %p55, %p56
      %p58 = scmp.ne.s32.totalorder %s47, %s48
      %p59 = scmp.eq.s32.totalorder %s25, 0
      %p60 = por %p58, %p59
      %p61 = scmp.ne.s32.totalorder %s47, %s48
      %p62 = scmp.eq.s32.totalorder %s26, 1
      %p63 = por %p61, %p62
      %p65 = scmp.ne.s32.totalorder %s48, %s64
      %p66 = scmp.eq.s32.totalorder %s26, 0
      %p67 = por %p65, %p66
      %s68 = ssub.s32 %s27, %s39
      %s69 = ssub.s32 %s28, %s35
      %s70 = sor.u32 %s68, %s69
      %p71 = scmp.eq.s32.totalorder %s70, 0
      %s73 = sadd.s32 %s72, 1
      %s74 = scalar_select %p71, %s72, %s73
      %p77 = pneg %p71
      %p78 = scmp.eq.s32.totalorder %s20, 1
      %p79 = por %p77, %p78
      %p80 = scmp.ne.s32.totalorder %s72, %s75
      %p81 = scmp.eq.s32.totalorder %s20, 0
      %p82 = por %p80, %p81
      %p83 = scmp.ne.s32.totalorder %s72, %s75
      %p84 = scmp.eq.s32.totalorder %s25, 1
      %p85 = por %p83, %p84
      %p86 = scmp.ne.s32.totalorder %s75, %s76
      %p87 = scmp.eq.s32.totalorder %s25, 0
      %p88 = por %p86, %p87
      %p89 = scmp.ne.s32.totalorder %s75, %s76
      %p90 = scmp.eq.s32.totalorder %s26, 1
      %p91 = por %p89, %p90
      %p93 = scmp.ne.s32.totalorder %s76, %s92
      %p94 = scmp.eq.s32.totalorder %s26, 0
      %p95 = por %p93, %p94
      %s96 = ssub.s32 %s27, %s39
      %p97 = scmp.eq.s32.totalorder %s96, 0
      %s99 = sadd.s32 %s98, 1
      %s100 = scalar_select %p97, %s98, %s99
      %p103 = pneg %p97
      %p104 = scmp.eq.s32.totalorder %s20, 1
      %p105 = por %p103, %p104
      %p106 = scmp.ne.s32.totalorder %s98, %s101
      %p107 = scmp.eq.s32.totalorder %s20, 0
      %p108 = por %p106, %p107
      %p109 = scmp.ne.s32.totalorder %s98, %s101
      %p110 = scmp.eq.s32.totalorder %s25, 1
      %p111 = por %p109, %p110
      %p112 = scmp.ne.s32.totalorder %s101, %s102
      %p113 = scmp.eq.s32.totalorder %s25, 0
      %p114 = por %p112, %p113
      %p115 = scmp.ne.s32.totalorder %s101, %s102
      %p116 = scmp.eq.s32.totalorder %s26, 1
      %p117 = por %p115, %p116
      %p119 = scmp.ne.s32.totalorder %s102, %s118
      %p120 = scmp.eq.s32.totalorder %s26, 0
      %p121 = por %p119, %p120
      %s122 = ssub.s32 %s27, %s39
      %s123 = ssub.s32 %s28, %s35
      %s124 = sor.u32 %s122, %s123
      %p125 = scmp.eq.s32.totalorder %s124, 0
      %s127 = sadd.s32 %s126, 1
      %s128 = scalar_select %p125, %s126, %s127
      %p131 = pneg %p125
      %p132 = scmp.eq.s32.totalorder %s20, 1
      %p133 = por %p131, %p132
      %p134 = scmp.ne.s32.totalorder %s126, %s129
      %p135 = scmp.eq.s32.totalorder %s20, 0
      %p136 = por %p134, %p135
      %p137 = scmp.ne.s32.totalorder %s126, %s129
      %p138 = scmp.eq.s32.totalorder %s25, 1
      %p139 = por %p137, %p138
      %p140 = scmp.ne.s32.totalorder %s129, %s130
      %p141 = scmp.eq.s32.totalorder %s25, 0
      %p142 = por %p140, %p141
      %p143 = scmp.ne.s32.totalorder %s129, %s130
      %p144 = scmp.eq.s32.totalorder %s26, 1
      %p145 = por %p143, %p144
      %p147 = scmp.ne.s32.totalorder %s130, %s146
      %p148 = scmp.eq.s32.totalorder %s26, 0
      %p149 = por %p147, %p148
      %s151 = sadd.s32 %s150, 1
      %p154 = scmp.eq.s32.totalorder %s20, 1
      %p155 = scmp.ne.s32.totalorder %s150, %s152
      %p156 = scmp.eq.s32.totalorder %s20, 0
      %p157 = por %p155, %p156
      %p158 = scmp.ne.s32.totalorder %s150, %s152
      %p159 = scmp.eq.s32.totalorder %s25, 1
      %p160 = por %p158, %p159
      %p161 = scmp.ne.s32.totalorder %s152, %s153
      %p162 = scmp.eq.s32.totalorder %s25, 0
      %p163 = por %p161, %p162
      %p164 = scmp.ne.s32.totalorder %s152, %s153
      %p165 = scmp.eq.s32.totalorder %s26, 1
      %p166 = por %p164, %p165
      %p168 = scmp.ne.s32.totalorder %s153, %s167
      %p169 = scmp.eq.s32.totalorder %s26, 0
      %p170 = por %p168, %p169
      %s172 = sadd.s32 %s171, 1
      %p175 = scmp.eq.s32.totalorder %s20, 1
      %p176 = scmp.ne.s32.totalorder %s171, %s173
      %p177 = scmp.eq.s32.totalorder %s20, 0
      %p178 = por %p176, %p177
      %p179 = scmp.ne.s32.totalorder %s171, %s173
      %p180 = scmp.eq.s32.totalorder %s25, 1
      %p181 = por %p179, %p180
      %p182 = scmp.ne.s32.totalorder %s173, %s174
      %p183 = scmp.eq.s32.totalorder %s25, 0
      %p184 = por %p182, %p183
      %p185 = scmp.ne.s32.totalorder %s173, %s174
      %p186 = scmp.eq.s32.totalorder %s26, 1
      %p187 = por %p185, %p186
      %p189 = scmp.ne.s32.totalorder %s174, %s188
      %p190 = scmp.eq.s32.totalorder %s26, 0
      %p191 = por %p189, %p190
      %s192 = ssub.s32 %s27, %s39
      %s193 = ssub.s32 %s28, %s35
      %s194 = sor.u32 %s192, %s193
      %p195 = scmp.eq.s32.totalorder %s194, 0
      %s197 = sadd.s32 %s196, 1
      %s198 = scalar_select %p195, %s196, %s197
      %p201 = pneg %p195
      %p202 = scmp.eq.s32.totalorder %s20, 1
      %p203 = por %p201, %p202
      %p204 = scmp.ne.s32.totalorder %s196, %s199
      %p205 = scmp.eq.s32.totalorder %s20, 0
      %p206 = por %p204, %p205
      %p207 = scmp.ne.s32.totalorder %s196, %s199
      %p208 = scmp.eq.s32.totalorder %s25, 1
      %p209 = por %p207, %p208
      %p210 = scmp.ne.s32.totalorder %s199, %s200
      %p211 = scmp.eq.s32.totalorder %s25, 0
      %p212 = por %p210, %p211
      %p213 = scmp.ne.s32.totalorder %s199, %s200
      %p214 = scmp.eq.s32.totalorder %s26, 1
      %p215 = por %p213, %p214
      %p217 = scmp.ne.s32.totalorder %s200, %s216
      %p218 = scmp.eq.s32.totalorder %s26, 0
      %p219 = por %p217, %p218
      %s220 = ssub.s32 %s27, %s39
      %s221 = ssub.s32 %s28, %s35
      %s222 = sor.u32 %s220, %s221
      %p223 = scmp.eq.s32.totalorder %s222, 0
      %s225 = sadd.s32 %s224, 1
      %s226 = scalar_select %p223, %s224, %s225
      %p229 = pneg %p223
      %p230 = scmp.eq.s32.totalorder %s20, 1
      %p231 = por %p229, %p230
      %p232 = scmp.ne.s32.totalorder %s224, %s227
      %p233 = scmp.eq.s32.totalorder %s20, 0
      %p234 = por %p232, %p233
      %p235 = scmp.ne.s32.totalorder %s224, %s227
      %p236 = scmp.eq.s32.totalorder %s25, 1
      %p237 = por %p235, %p236
      %p238 = scmp.ne.s32.totalorder %s227, %s228
      %p239 = scmp.eq.s32.totalorder %s25, 0
      %p240 = por %p238, %p239
      %p241 = scmp.ne.s32.totalorder %s227, %s228
      %p242 = scmp.eq.s32.totalorder %s26, 1
      %p243 = por %p241, %p242
      %p245 = scmp.ne.s32.totalorder %s228, %s244
      %p246 = scmp.eq.s32.totalorder %s26, 0
      %p247 = por %p245, %p246
      %p248 = scmp.le.s32.totalorder 1, %s20
      %p249 = scmp.lt.s32.totalorder %s20, 3
      %p250 = pnand %p248, %p249
      %p251 = pneg %p250
      // Predicated region
      $region9: #{greedy_decoding_pallas.1} parent=5 // pred_check
        _
      $region10: #{greedy_decoding_pallas.1} parent=5 // pred_check_branch
        %253 = sbr.rel (%p250) target = $region12
      $region11: #{greedy_decoding_pallas.1} parent=5 // pred_region
        %s254 = ssub.s32 %s20, 1
        // Predicated region
        $region13: #{greedy_decoding_pallas.1} parent=11 // pred_check
          %p255 = pneg %p163
        $region14: #{greedy_decoding_pallas.1} parent=11 // pred_check_branch
          %257 = sbr.rel (%p255) target = $region16
        $region15: #{greedy_decoding_pallas.1} parent=11 // pred_region
          _
        $region16: #{greedy_decoding_pallas.1} parent=11 // pred_fallthru
          _
        // Predicated region
        $region17: #{greedy_decoding_pallas.1} parent=11 // pred_check
          %p258 = pneg %p184
        $region18: #{greedy_decoding_pallas.1} parent=11 // pred_check_branch
          %260 = sbr.rel (%p258) target = $region20
        $region19: #{greedy_decoding_pallas.1} parent=11 // pred_region
          _
        $region20: #{greedy_decoding_pallas.1} parent=11 // pred_fallthru
          _
      $region12: #{greedy_decoding_pallas.1} parent=5 // pred_fallthru
        _
      %p261 = scmp.lt.s32.totalorder %s20, 2
      // Predicated region
      $region21: #{greedy_decoding_pallas.1} parent=5 // pred_check
        %p262 = pneg %p261
      $region22: #{greedy_decoding_pallas.1} parent=5 // pred_check_branch
        %264 = sbr.rel (%p262) target = $region24
      $region23: #{greedy_decoding_pallas.1} parent=5 // pred_region
        // Predicated region
        $region25: #{greedy_decoding_pallas.1} parent=23 // pred_check
          %p265 = pneg %p54
        $region26: #{greedy_decoding_pallas.1} parent=23 // pred_check_branch
          %267 = sbr.rel (%p265) target = $region28
        $region27: #{greedy_decoding_pallas.1} parent=23 // pred_region
          %p268 = scmp.lt.s32.totalorder %s27, 1
          %s269 = scalar_select %p268, %s27, 1
          %p270 = scmp.lt.s32.totalorder %s28, 0
          %s271 = scalar_select %p270, %s28, 0
          %s272 = sadd.s32 %s271, %s269
          %s273 = smul.addr %s272, 8
          %s274 = scalar_lea.vmem %s0, %s273
        $region28: #{greedy_decoding_pallas.1} parent=23 // pred_fallthru
          _
        // Predicated region
        $region29: #{greedy_decoding_pallas.1} parent=23 // pred_check
          %p275 = pneg %p82
        $region30: #{greedy_decoding_pallas.1} parent=23 // pred_check_branch
          %277 = sbr.rel (%p275) target = $region32
        $region31: #{greedy_decoding_pallas.1} parent=23 // pred_region
          %p278 = scmp.lt.s32.totalorder %s27, 1
          %s279 = scalar_select %p278, %s27, 1
          %p280 = scmp.lt.s32.totalorder %s28, 0
          %s281 = scalar_select %p280, %s28, 0
          %s282 = sadd.s32 %s281, %s279
          %s283 = smul.addr %s282, 8
          %s284 = scalar_lea.vmem %s1, %s283
        $region32: #{greedy_decoding_pallas.1} parent=23 // pred_fallthru
          _
        // Predicated region
        $region33: #{greedy_decoding_pallas.1} parent=23 // pred_check
          %p285 = pneg %p108
        $region34: #{greedy_decoding_pallas.1} parent=23 // pred_check_branch
          %287 = sbr.rel (%p285) target = $region36
        $region35: #{greedy_decoding_pallas.1} parent=23 // pred_region
          %p288 = scmp.lt.s32.totalorder %s27, 1
          %s289 = scalar_select %p288, %s27, 1
          %s290 = smul.addr %s289, 8
          %s291 = scalar_lea.vmem %s2, %s290
        $region36: #{greedy_decoding_pallas.1} parent=23 // pred_fallthru
          _
        // Predicated region
        $region37: #{greedy_decoding_pallas.1} parent=23 // pred_check
          %p292 = pneg %p136
        $region38: #{greedy_decoding_pallas.1} parent=23 // pred_check_branch
          %294 = sbr.rel (%p292) target = $region40
        $region39: #{greedy_decoding_pallas.1} parent=23 // pred_region
          %p295 = scmp.lt.s32.totalorder %s27, 1
          %s296 = scalar_select %p295, %s27, 1
          %p297 = scmp.lt.s32.totalorder %s28, 0
          %s298 = scalar_select %p297, %s28, 0
          %s299 = sadd.s32 %s298, %s296
          %s300 = smul.addr %s299, 8
          %s301 = scalar_lea.vmem %s3, %s300
        $region40: #{greedy_decoding_pallas.1} parent=23 // pred_fallthru
          _
      $region24: #{greedy_decoding_pallas.1} parent=5 // pred_fallthru
        _
      %p302 = scmp.le.s32.totalorder 1, %s20
      %p303 = scmp.lt.s32.totalorder %s20, 3
      %p304 = pnand %p302, %p303
      %p305 = pneg %p304
      // Predicated region
      $region41: #{greedy_decoding_pallas.1} parent=5 // pred_check
        _
      $region42: #{greedy_decoding_pallas.1} parent=5 // pred_check_branch
        %307 = sbr.rel (%p304) target = $region44
      $region43: #{greedy_decoding_pallas.1} parent=5 // pred_region
        %s308 = ssub.s32 %s20, 1
        %p309 = scmp.lt.s32.totalorder %s29, 1
        %s310 = scalar_select %p309, %s29, 1
        %p311 = scmp.lt.s32.totalorder %s30, 0
        %s312 = scalar_select %p311, %s30, 0
        %s313 = sadd.s32 %s312, %s310
        %s314 = smul.addr %s313, 8
        %s315 = scalar_lea.vmem %s0, %s314
        %p316 = pneg %p60
        %p317 = pneg %p57
        %p318 = scmp.lt.s32.totalorder %s29, 1
        %s319 = scalar_select %p318, %s29, 1
        %p320 = scmp.lt.s32.totalorder %s30, 0
        %s321 = scalar_select %p320, %s30, 0
        %s322 = sadd.s32 %s321, %s319
        %s323 = smul.addr %s322, 8
        %s324 = scalar_lea.vmem %s1, %s323
        %p325 = pneg %p88
        %p326 = pneg %p85
        %p327 = scmp.lt.s32.totalorder %s29, 1
        %s328 = scalar_select %p327, %s29, 1
        %s329 = smul.addr %s328, 8
        %s330 = scalar_lea.vmem %s2, %s329
        %p331 = pneg %p114
        %p332 = pneg %p111
        %p333 = scmp.lt.s32.totalorder %s29, 1
        %s334 = scalar_select %p333, %s29, 1
        %p335 = scmp.lt.s32.totalorder %s30, 0
        %s336 = scalar_select %p335, %s30, 0
        %s337 = sadd.s32 %s336, %s334
        %s338 = smul.addr %s337, 8
        %s339 = scalar_lea.vmem %s3, %s338
        %p340 = pneg %p142
        %p341 = pneg %p139
        %p342 = pneg %p163
        %p343 = pneg %p160
        %p344 = pneg %p184
        %p345 = pneg %p181
        %p346 = pneg %p212
        %p347 = pneg %p209
        %s348 = sand.u32 %s199, 1
        %s349 = scalar_lea.sflag [#allocation3], %s348
        %s350 = sand.u32 %s199, 1
        %s351 = scalar_lea.vmem [#allocation2], %s350
        %p352 = pneg %p240
        %p353 = pneg %p237
        %s354 = sand.u32 %s227, 1
        %s355 = scalar_lea.sflag [#allocation5], %s354
        %s356 = sand.u32 %s227, 1
        %s357 = scalar_lea.vmem [#allocation4], %s356
        %p358 = scmp.lt.s32.totalorder %s29, 1
        %s359 = scalar_select %p358, %s29, 1
        %p360 = scmp.lt.s32.totalorder %s30, 0
        %s361 = scalar_select %p360, %s30, 0
        %s362 = sadd.s32 %s361, %s359
        %s363 = smul.addr %s362, 8
        %s364 = scalar_lea.vmem %s0, %s363
        %p365 = scmp.lt.s32.totalorder %s29, 1
        %s366 = scalar_select %p365, %s29, 1
        %p367 = scmp.lt.s32.totalorder %s30, 0
        %s368 = scalar_select %p367, %s30, 0
        %s369 = sadd.s32 %s368, %s366
        %s370 = smul.addr %s369, 8
        %s371 = scalar_lea.vmem %s1, %s370
        %p372 = scmp.lt.s32.totalorder %s29, 1
        %s373 = scalar_select %p372, %s29, 1
        %s374 = smul.addr %s373, 8
        %s375 = scalar_lea.vmem %s2, %s374
        %p376 = scmp.lt.s32.totalorder %s29, 1
        %s377 = scalar_select %p376, %s29, 1
        %p378 = scmp.lt.s32.totalorder %s30, 0
        %s379 = scalar_select %p378, %s30, 0
        %s380 = sadd.s32 %s379, %s377
        %s381 = smul.addr %s380, 8
        %s382 = scalar_lea.vmem %s3, %s381
        %v383 = vld [vmem:[%s364] sm:$0xff]
        %v384 = vld [vmem:[%s371] sm:$0xff]
        %v385 = vlaneseq
        %v386 = vand.u32 %v385, 127
        %v387 = vlaneseq
        %v388 = vshrl.u32 %v387, 7
        %s389 = smul.u32 %s30, 8
        %v390 = vstv %s389
        %v391 = vadd.s32 %v388, %v390
        %vm392 = vcmp.eq.s32.totalorder %v386, %v391
        %v393 = vsel %vm392, -inf, %v383
        %vm394 = vcmp.eq.s32.totalorder %v384, 0
        %v395 = vsel %vm394, 1, 0
        %396 = vset.pattern.permute.xlu0 0
        %397 = vperm.xlu0 %396, %v395
        %v398 = vpop.permute.xlu0 %397
        %vm399 = vcmp.eq.s32.totalorder %v398, 1
        %v400 = vsel %vm399, -inf, %v393
        %vm401 = vcmask 64512
        %v402 = vsel %vm401, %v400, -inf
        %403 = vmax.xlane.f32.xlu0 %v402
        %v404 = vpop.xlane.xlu0 %403
        %vm405 = vcmp.eq.f32.partialorder %v400, %v404
        %v406 = vsel %vm405, %v386, 8
        %v407 = vsel %vm401, %v406, 2147483647
        %v408 = vand.u32 %v407, 65535
        %v409 = vshra.s32 %v407, 16
        %v410 = vcvt.s32.f32 %v408
        %v411 = vcvt.s32.f32 %v409
        %412 = vmin.xlane.f32.xlu0 %v411
        %v413 = vpop.xlane.xlu0 %412
        %vm414 = vcmp.eq.f32.partialorder %v411, %v413
        %v415 = vsel %vm414, %v410, inf
        %416 = vmin.xlane.f32.xlu0 %v415
        %v417 = vpop.xlane.xlu0 %416
        %v418 = vcvt.f32.s32 %v417
        %v419 = vcvt.f32.s32 %v413
        %v420 = vshll.u32 %v419, 16
        %v421 = vadd.s32 %v420, %v418
        %vm422 = vcmp.eq.s32.totalorder %v386, %v421
        %v423 = vsel %vm422, 1, 0
        %v424 = vcvt.s32.f32 %v423
        %v425 = vld [vmem:[%s375] sm:$0xff]
        %v427 = vsel %vm401, %v424, 0
        %429 = vmatpush.msra.mxu0 0.0
        %430 = vmatpush.msra.mxu0 0.0
        %431 = vmatpush.msra.mxu0 0.0
        %432 = vmatpush.msra.mxu0 0.0
        %433 = vmatpush.msra.mxu0 0.0
        %434 = vmatpush.msra.mxu0 0.0
        %435 = vmatpush.msra.mxu0 0.0
        %436 = vmatpush.msra.mxu0 0.0
        %437 = vmatpush.msra.mxu0 0.0
        %438 = vmatpush.msra.mxu0 0.0
        %439 = vmatpush.msra.mxu0 0.0
        %440 = vmatpush.msra.mxu0 0.0
        %441 = vmatpush.msra.mxu0 0.0
        %442 = vmatpush.msra.mxu0 0.0
        %443 = vmatpush.msra.mxu0 0.0
        %444 = vmatpush.msra.mxu0 %v425
        %445 = vmatmul.f32.gmra.mxu0 %v427
        %v446 = vpop.f32.mrf.mxu0
        %v447 = vadd.f32 0.0, %v446
        %448 = vdwg.mxu0
        %v449 = vld [vmem:[%s4] sm:$0xff]
        %v450 = vld [vmem:[%s4 + $0x8] sm:$0xff]
        %v451 = vld [vmem:[%s4 + $0x10] sm:$0xff]
        %v452 = vld [vmem:[%s4 + $0x18] sm:$0xff]
        %v453 = vld [vmem:[%s4 + $0x20] sm:$0xff]
        %v454 = vld [vmem:[%s4 + $0x28] sm:$0xff]
        %v455 = vld [vmem:[%s4 + $0x30] sm:$0xff]
        %v456 = vld [vmem:[%s4 + $0x38] sm:$0xff]
        %v457 = vld [vmem:[%s4 + $0x40] sm:$0xff]
        %v458 = vld [vmem:[%s4 + $0x48] sm:$0xff]
        %v459 = vld [vmem:[%s4 + $0x50] sm:$0xff]
        %v460 = vld [vmem:[%s4 + $0x58] sm:$0xff]
        %v461 = vld [vmem:[%s4 + $0x60] sm:$0xff]
        %v462 = vld [vmem:[%s4 + $0x68] sm:$0xff]
        %v463 = vld [vmem:[%s4 + $0x70] sm:$0xff]
        %v464 = vld [vmem:[%s4 + $0x78] sm:$0xff]
        %v465 = vld [vmem:[%s4 + $0x80] sm:$0xff]
        %v466 = vld [vmem:[%s4 + $0x88] sm:$0xff]
        %v467 = vld [vmem:[%s4 + $0x90] sm:$0xff]
        %v468 = vld [vmem:[%s4 + $0x98] sm:$0xff]
        %v469 = vld [vmem:[%s4 + $0xa0] sm:$0xff]
        %v470 = vld [vmem:[%s4 + $0xa8] sm:$0xff]
        %v471 = vld [vmem:[%s4 + $0xb0] sm:$0xff]
        %v472 = vld [vmem:[%s4 + $0xb8] sm:$0xff]
        %v473 = vld [vmem:[%s4 + $0xc0] sm:$0xff]
        %v474 = vld [vmem:[%s4 + $0xc8] sm:$0xff]
        %v475 = vld [vmem:[%s4 + $0xd0] sm:$0xff]
        %v476 = vld [vmem:[%s4 + $0xd8] sm:$0xff]
        %v477 = vld [vmem:[%s4 + $0xe0] sm:$0xff]
        %v478 = vld [vmem:[%s4 + $0xe8] sm:$0xff]
        %v479 = vld [vmem:[%s4 + $0xf0] sm:$0xff]
        %v480 = vld [vmem:[%s4 + $0xf8] sm:$0xff]
        %v481 = vld [vmem:[%s4 + $0x100] sm:$0xff]
        %v482 = vld [vmem:[%s4 + $0x108] sm:$0xff]
        %v483 = vld [vmem:[%s4 + $0x110] sm:$0xff]
        %v484 = vld [vmem:[%s4 + $0x118] sm:$0xff]
        %v485 = vld [vmem:[%s4 + $0x120] sm:$0xff]
        %v486 = vld [vmem:[%s4 + $0x128] sm:$0xff]
        %v487 = vld [vmem:[%s4 + $0x130] sm:$0xff]
        %v488 = vld [vmem:[%s4 + $0x138] sm:$0xff]
        %v489 = vld [vmem:[%s4 + $0x140] sm:$0xff]
        %v490 = vld [vmem:[%s4 + $0x148] sm:$0xff]
        %v491 = vld [vmem:[%s4 + $0x150] sm:$0xff]
        %v492 = vld [vmem:[%s4 + $0x158] sm:$0xff]
        %v493 = vld [vmem:[%s4 + $0x160] sm:$0xff]
        %v494 = vld [vmem:[%s4 + $0x168] sm:$0xff]
        %v495 = vld [vmem:[%s4 + $0x170] sm:$0xff]
        %v496 = vld [vmem:[%s4 + $0x178] sm:$0xff]
        %v497 = vld [vmem:[%s4 + $0x180] sm:$0xff]
        %v498 = vld [vmem:[%s4 + $0x188] sm:$0xff]
        %v499 = vld [vmem:[%s4 + $0x190] sm:$0xff]
        %v500 = vld [vmem:[%s4 + $0x198] sm:$0xff]
        %v501 = vld [vmem:[%s4 + $0x1a0] sm:$0xff]
        %v502 = vld [vmem:[%s4 + $0x1a8] sm:$0xff]
        %v503 = vld [vmem:[%s4 + $0x1b0] sm:$0xff]
        %v504 = vld [vmem:[%s4 + $0x1b8] sm:$0xff]
        %v505 = vld [vmem:[%s4 + $0x1c0] sm:$0xff]
        %v506 = vld [vmem:[%s4 + $0x1c8] sm:$0xff]
        %v507 = vld [vmem:[%s4 + $0x1d0] sm:$0xff]
        %v508 = vld [vmem:[%s4 + $0x1d8] sm:$0xff]
        %v509 = vld [vmem:[%s4 + $0x1e0] sm:$0xff]
        %v510 = vld [vmem:[%s4 + $0x1e8] sm:$0xff]
        %v511 = vld [vmem:[%s4 + $0x1f0] sm:$0xff]
        %v512 = vld [vmem:[%s4 + $0x1f8] sm:$0xff]
        %v513 = vld [vmem:[%s4 + $0x200] sm:$0xff]
        %v514 = vld [vmem:[%s4 + $0x208] sm:$0xff]
        %v515 = vld [vmem:[%s4 + $0x210] sm:$0xff]
        %v516 = vld [vmem:[%s4 + $0x218] sm:$0xff]
        %v517 = vld [vmem:[%s4 + $0x220] sm:$0xff]
        %v518 = vld [vmem:[%s4 + $0x228] sm:$0xff]
        %v519 = vld [vmem:[%s4 + $0x230] sm:$0xff]
        %v520 = vld [vmem:[%s4 + $0x238] sm:$0xff]
        %v521 = vld [vmem:[%s4 + $0x240] sm:$0xff]
        %v522 = vld [vmem:[%s4 + $0x248] sm:$0xff]
        %v523 = vld [vmem:[%s4 + $0x250] sm:$0xff]
        %v524 = vld [vmem:[%s4 + $0x258] sm:$0xff]
        %v525 = vld [vmem:[%s4 + $0x260] sm:$0xff]
        %v526 = vld [vmem:[%s4 + $0x268] sm:$0xff]
        %v527 = vld [vmem:[%s4 + $0x270] sm:$0xff]
        %v528 = vld [vmem:[%s4 + $0x278] sm:$0xff]
        %v529 = vld [vmem:[%s4 + $0x280] sm:$0xff]
        %v530 = vld [vmem:[%s4 + $0x288] sm:$0xff]
        %v531 = vld [vmem:[%s4 + $0x290] sm:$0xff]
        %v532 = vld [vmem:[%s4 + $0x298] sm:$0xff]
        %v533 = vld [vmem:[%s4 + $0x2a0] sm:$0xff]
        %v534 = vld [vmem:[%s4 + $0x2a8] sm:$0xff]
        %v535 = vld [vmem:[%s4 + $0x2b0] sm:$0xff]
        %v536 = vld [vmem:[%s4 + $0x2b8] sm:$0xff]
        %v537 = vld [vmem:[%s4 + $0x2c0] sm:$0xff]
        %v538 = vld [vmem:[%s4 + $0x2c8] sm:$0xff]
        %v539 = vld [vmem:[%s4 + $0x2d0] sm:$0xff]
        %v540 = vld [vmem:[%s4 + $0x2d8] sm:$0xff]
        %v541 = vld [vmem:[%s4 + $0x2e0] sm:$0xff]
        %v542 = vld [vmem:[%s4 + $0x2e8] sm:$0xff]
        %v543 = vld [vmem:[%s4 + $0x2f0] sm:$0xff]
        %v544 = vld [vmem:[%s4 + $0x2f8] sm:$0xff]
        %v545 = vld [vmem:[%s4 + $0x300] sm:$0xff]
        %v546 = vld [vmem:[%s4 + $0x308] sm:$0xff]
        %v547 = vld [vmem:[%s4 + $0x310] sm:$0xff]
        %v548 = vld [vmem:[%s4 + $0x318] sm:$0xff]
        %v549 = vld [vmem:[%s4 + $0x320] sm:$0xff]
        %v550 = vld [vmem:[%s4 + $0x328] sm:$0xff]
        %v551 = vld [vmem:[%s4 + $0x330] sm:$0xff]
        %v552 = vld [vmem:[%s4 + $0x338] sm:$0xff]
        %v553 = vld [vmem:[%s4 + $0x340] sm:$0xff]
        %v554 = vld [vmem:[%s4 + $0x348] sm:$0xff]
        %v555 = vld [vmem:[%s4 + $0x350] sm:$0xff]
        %v556 = vld [vmem:[%s4 + $0x358] sm:$0xff]
        %v557 = vld [vmem:[%s4 + $0x360] sm:$0xff]
        %v558 = vld [vmem:[%s4 + $0x368] sm:$0xff]
        %v559 = vld [vmem:[%s4 + $0x370] sm:$0xff]
        %v560 = vld [vmem:[%s4 + $0x378] sm:$0xff]
        %v561 = vld [vmem:[%s4 + $0x380] sm:$0xff]
        %v562 = vld [vmem:[%s4 + $0x388] sm:$0xff]
        %v563 = vld [vmem:[%s4 + $0x390] sm:$0xff]
        %v564 = vld [vmem:[%s4 + $0x398] sm:$0xff]
        %v565 = vld [vmem:[%s4 + $0x3a0] sm:$0xff]
        %v566 = vld [vmem:[%s4 + $0x3a8] sm:$0xff]
        %v567 = vld [vmem:[%s4 + $0x3b0] sm:$0xff]
        %v568 = vld [vmem:[%s4 + $0x3b8] sm:$0xff]
        %v569 = vld [vmem:[%s4 + $0x3c0] sm:$0xff]
        %v570 = vld [vmem:[%s4 + $0x3c8] sm:$0xff]
        %v571 = vld [vmem:[%s4 + $0x3d0] sm:$0xff]
        %v572 = vld [vmem:[%s4 + $0x3d8] sm:$0xff]
        %v573 = vld [vmem:[%s4 + $0x3e0] sm:$0xff]
        %v574 = vld [vmem:[%s4 + $0x3e8] sm:$0xff]
        %v575 = vld [vmem:[%s4 + $0x3f0] sm:$0xff]
        %v576 = vld [vmem:[%s4 + $0x3f8] sm:$0xff]
        %vm577 = vcmask 261120
        %v579 = vsel %vm577, %v447, 0
        %581 = vmatpush.msra.mxu0 0.0
        %582 = vmatpush.msra.mxu0 0.0
        %583 = vmatpush.msra.mxu0 0.0
        %584 = vmatpush.msra.mxu0 0.0
        %585 = vmatpush.msra.mxu0 0.0
        %586 = vmatpush.msra.mxu0 0.0
        %587 = vmatpush.msra.mxu0 0.0
        %588 = vmatpush.msra.mxu0 0.0
        %589 = vmatpush.msra.mxu0 0.0
        %590 = vmatpush.msra.mxu0 0.0
        %591 = vmatpush.msra.mxu0 0.0
        %592 = vmatpush.msra.mxu0 0.0
        %593 = vmatpush.msra.mxu0 %v545
        %594 = vmatpush.msra.mxu0 %v513
        %595 = vmatpush.msra.mxu0 %v481
        %596 = vmatpush.msra.mxu0 %v449
        %597 = vmatmul.f32.gmra.mxu0 %v579
        %v598 = vpop.f32.mrf.mxu0
        %v599 = vadd.f32 0.0, %v598
        %600 = vdwg.mxu0
        %601 = vmatpush.msra.mxu0 0.0
        %602 = vmatpush.msra.mxu0 0.0
        %603 = vmatpush.msra.mxu0 0.0
        %604 = vmatpush.msra.mxu0 0.0
        %605 = vmatpush.msra.mxu0 0.0
        %606 = vmatpush.msra.mxu0 0.0
        %607 = vmatpush.msra.mxu0 0.0
        %608 = vmatpush.msra.mxu0 0.0
        %609 = vmatpush.msra.mxu0 0.0
        %610 = vmatpush.msra.mxu0 0.0
        %611 = vmatpush.msra.mxu0 0.0
        %612 = vmatpush.msra.mxu0 0.0
        %613 = vmatpush.msra.mxu0 %v546
        %614 = vmatpush.msra.mxu0 %v514
        %615 = vmatpush.msra.mxu0 %v482
        %616 = vmatpush.msra.mxu0 %v450
        %617 = vmatmul.f32.gmra.mxu0 %v579
        %v618 = vpop.f32.mrf.mxu0
        %v619 = vadd.f32 0.0, %v618
        %620 = vdwg.mxu0
        %621 = vmatpush.msra.mxu0 0.0
        %622 = vmatpush.msra.mxu0 0.0
        %623 = vmatpush.msra.mxu0 0.0
        %624 = vmatpush.msra.mxu0 0.0
        %625 = vmatpush.msra.mxu0 0.0
        %626 = vmatpush.msra.mxu0 0.0
        %627 = vmatpush.msra.mxu0 0.0
        %628 = vmatpush.msra.mxu0 0.0
        %629 = vmatpush.msra.mxu0 0.0
        %630 = vmatpush.msra.mxu0 0.0
        %631 = vmatpush.msra.mxu0 0.0
        %632 = vmatpush.msra.mxu0 0.0
        %633 = vmatpush.msra.mxu0 %v547
        %634 = vmatpush.msra.mxu0 %v515
        %635 = vmatpush.msra.mxu0 %v483
        %636 = vmatpush.msra.mxu0 %v451
        %637 = vmatmul.f32.gmra.mxu0 %v579
        %v638 = vpop.f32.mrf.mxu0
        %v639 = vadd.f32 0.0, %v638
        %640 = vdwg.mxu0
        %641 = vmatpush.msra.mxu0 0.0
        %642 = vmatpush.msra.mxu0 0.0
        %643 = vmatpush.msra.mxu0 0.0
        %644 = vmatpush.msra.mxu0 0.0
        %645 = vmatpush.msra.mxu0 0.0
        %646 = vmatpush.msra.mxu0 0.0
        %647 = vmatpush.msra.mxu0 0.0
        %648 = vmatpush.msra.mxu0 0.0
        %649 = vmatpush.msra.mxu0 0.0
        %650 = vmatpush.msra.mxu0 0.0
        %651 = vmatpush.msra.mxu0 0.0
        %652 = vmatpush.msra.mxu0 0.0
        %653 = vmatpush.msra.mxu0 %v548
        %654 = vmatpush.msra.mxu0 %v516
        %655 = vmatpush.msra.mxu0 %v484
        %656 = vmatpush.msra.mxu0 %v452
        %657 = vmatmul.f32.gmra.mxu0 %v579
        %v658 = vpop.f32.mrf.mxu0
        %v659 = vadd.f32 0.0, %v658
        %660 = vdwg.mxu0
        %661 = vmatpush.msra.mxu0 0.0
        %662 = vmatpush.msra.mxu0 0.0
        %663 = vmatpush.msra.mxu0 0.0
        %664 = vmatpush.msra.mxu0 0.0
        %665 = vmatpush.msra.mxu0 0.0
        %666 = vmatpush.msra.mxu0 0.0
        %667 = vmatpush.msra.mxu0 0.0
        %668 = vmatpush.msra.mxu0 0.0
        %669 = vmatpush.msra.mxu0 0.0
        %670 = vmatpush.msra.mxu0 0.0
        %671 = vmatpush.msra.mxu0 0.0
        %672 = vmatpush.msra.mxu0 0.0
        %673 = vmatpush.msra.mxu0 %v549
        %674 = vmatpush.msra.mxu0 %v517
        %675 = vmatpush.msra.mxu0 %v485
        %676 = vmatpush.msra.mxu0 %v453
        %677 = vmatmul.f32.gmra.mxu0 %v579
        %v678 = vpop.f32.mrf.mxu0
        %v679 = vadd.f32 0.0, %v678
        %680 = vdwg.mxu0
        %681 = vmatpush.msra.mxu0 0.0
        %682 = vmatpush.msra.mxu0 0.0
        %683 = vmatpush.msra.mxu0 0.0
        %684 = vmatpush.msra.mxu0 0.0
        %685 = vmatpush.msra.mxu0 0.0
        %686 = vmatpush.msra.mxu0 0.0
        %687 = vmatpush.msra.mxu0 0.0
        %688 = vmatpush.msra.mxu0 0.0
        %689 = vmatpush.msra.mxu0 0.0
        %690 = vmatpush.msra.mxu0 0.0
        %691 = vmatpush.msra.mxu0 0.0
        %692 = vmatpush.msra.mxu0 0.0
        %693 = vmatpush.msra.mxu0 %v550
        %694 = vmatpush.msra.mxu0 %v518
        %695 = vmatpush.msra.mxu0 %v486
        %696 = vmatpush.msra.mxu0 %v454
        %697 = vmatmul.f32.gmra.mxu0 %v579
        %v698 = vpop.f32.mrf.mxu0
        %v699 = vadd.f32 0.0, %v698
        %700 = vdwg.mxu0
        %701 = vmatpush.msra.mxu0 0.0
        %702 = vmatpush.msra.mxu0 0.0
        %703 = vmatpush.msra.mxu0 0.0
        %704 = vmatpush.msra.mxu0 0.0
        %705 = vmatpush.msra.mxu0 0.0
        %706 = vmatpush.msra.mxu0 0.0
        %707 = vmatpush.msra.mxu0 0.0
        %708 = vmatpush.msra.mxu0 0.0
        %709 = vmatpush.msra.mxu0 0.0
        %710 = vmatpush.msra.mxu0 0.0
        %711 = vmatpush.msra.mxu0 0.0
        %712 = vmatpush.msra.mxu0 0.0
        %713 = vmatpush.msra.mxu0 %v551
        %714 = vmatpush.msra.mxu0 %v519
        %715 = vmatpush.msra.mxu0 %v487
        %716 = vmatpush.msra.mxu0 %v455
        %717 = vmatmul.f32.gmra.mxu0 %v579
        %v718 = vpop.f32.mrf.mxu0
        %v719 = vadd.f32 0.0, %v718
        %720 = vdwg.mxu0
        %721 = vmatpush.msra.mxu0 0.0
        %722 = vmatpush.msra.mxu0 0.0
        %723 = vmatpush.msra.mxu0 0.0
        %724 = vmatpush.msra.mxu0 0.0
        %725 = vmatpush.msra.mxu0 0.0
        %726 = vmatpush.msra.mxu0 0.0
        %727 = vmatpush.msra.mxu0 0.0
        %728 = vmatpush.msra.mxu0 0.0
        %729 = vmatpush.msra.mxu0 0.0
        %730 = vmatpush.msra.mxu0 0.0
        %731 = vmatpush.msra.mxu0 0.0
        %732 = vmatpush.msra.mxu0 0.0
        %733 = vmatpush.msra.mxu0 %v552
        %734 = vmatpush.msra.mxu0 %v520
        %735 = vmatpush.msra.mxu0 %v488
        %736 = vmatpush.msra.mxu0 %v456
        %737 = vmatmul.f32.gmra.mxu0 %v579
        %v738 = vpop.f32.mrf.mxu0
        %v739 = vadd.f32 0.0, %v738
        %740 = vdwg.mxu0
        %741 = vmatpush.msra.mxu0 0.0
        %742 = vmatpush.msra.mxu0 0.0
        %743 = vmatpush.msra.mxu0 0.0
        %744 = vmatpush.msra.mxu0 0.0
        %745 = vmatpush.msra.mxu0 0.0
        %746 = vmatpush.msra.mxu0 0.0
        %747 = vmatpush.msra.mxu0 0.0
        %748 = vmatpush.msra.mxu0 0.0
        %749 = vmatpush.msra.mxu0 0.0
        %750 = vmatpush.msra.mxu0 0.0
        %751 = vmatpush.msra.mxu0 0.0
        %752 = vmatpush.msra.mxu0 0.0
        %753 = vmatpush.msra.mxu0 %v553
        %754 = vmatpush.msra.mxu0 %v521
        %755 = vmatpush.msra.mxu0 %v489
        %756 = vmatpush.msra.mxu0 %v457
        %757 = vmatmul.f32.gmra.mxu0 %v579
        %v758 = vpop.f32.mrf.mxu0
        %v759 = vadd.f32 0.0, %v758
        %760 = vdwg.mxu0
        %761 = vmatpush.msra.mxu0 0.0
        %762 = vmatpush.msra.mxu0 0.0
        %763 = vmatpush.msra.mxu0 0.0
        %764 = vmatpush.msra.mxu0 0.0
        %765 = vmatpush.msra.mxu0 0.0
        %766 = vmatpush.msra.mxu0 0.0
        %767 = vmatpush.msra.mxu0 0.0
        %768 = vmatpush.msra.mxu0 0.0
        %769 = vmatpush.msra.mxu0 0.0
        %770 = vmatpush.msra.mxu0 0.0
        %771 = vmatpush.msra.mxu0 0.0
        %772 = vmatpush.msra.mxu0 0.0
        %773 = vmatpush.msra.mxu0 %v554
        %774 = vmatpush.msra.mxu0 %v522
        %775 = vmatpush.msra.mxu0 %v490
        %776 = vmatpush.msra.mxu0 %v458
        %777 = vmatmul.f32.gmra.mxu0 %v579
        %v778 = vpop.f32.mrf.mxu0
        %v779 = vadd.f32 0.0, %v778
        %780 = vdwg.mxu0
        %781 = vmatpush.msra.mxu0 0.0
        %782 = vmatpush.msra.mxu0 0.0
        %783 = vmatpush.msra.mxu0 0.0
        %784 = vmatpush.msra.mxu0 0.0
        %785 = vmatpush.msra.mxu0 0.0
        %786 = vmatpush.msra.mxu0 0.0
        %787 = vmatpush.msra.mxu0 0.0
        %788 = vmatpush.msra.mxu0 0.0
        %789 = vmatpush.msra.mxu0 0.0
        %790 = vmatpush.msra.mxu0 0.0
        %791 = vmatpush.msra.mxu0 0.0
        %792 = vmatpush.msra.mxu0 0.0
        %793 = vmatpush.msra.mxu0 %v555
        %794 = vmatpush.msra.mxu0 %v523
        %795 = vmatpush.msra.mxu0 %v491
        %796 = vmatpush.msra.mxu0 %v459
        %797 = vmatmul.f32.gmra.mxu0 %v579
        %v798 = vpop.f32.mrf.mxu0
        %v799 = vadd.f32 0.0, %v798
        %800 = vdwg.mxu0
        %801 = vmatpush.msra.mxu0 0.0
        %802 = vmatpush.msra.mxu0 0.0
        %803 = vmatpush.msra.mxu0 0.0
        %804 = vmatpush.msra.mxu0 0.0
        %805 = vmatpush.msra.mxu0 0.0
        %806 = vmatpush.msra.mxu0 0.0
        %807 = vmatpush.msra.mxu0 0.0
        %808 = vmatpush.msra.mxu0 0.0
        %809 = vmatpush.msra.mxu0 0.0
        %810 = vmatpush.msra.mxu0 0.0
        %811 = vmatpush.msra.mxu0 0.0
        %812 = vmatpush.msra.mxu0 0.0
        %813 = vmatpush.msra.mxu0 %v556
        %814 = vmatpush.msra.mxu0 %v524
        %815 = vmatpush.msra.mxu0 %v492
        %816 = vmatpush.msra.mxu0 %v460
        %817 = vmatmul.f32.gmra.mxu0 %v579
        %v818 = vpop.f32.mrf.mxu0
        %v819 = vadd.f32 0.0, %v818
        %820 = vdwg.mxu0
        %821 = vmatpush.msra.mxu0 0.0
        %822 = vmatpush.msra.mxu0 0.0
        %823 = vmatpush.msra.mxu0 0.0
        %824 = vmatpush.msra.mxu0 0.0
        %825 = vmatpush.msra.mxu0 0.0
        %826 = vmatpush.msra.mxu0 0.0
        %827 = vmatpush.msra.mxu0 0.0
        %828 = vmatpush.msra.mxu0 0.0
        %829 = vmatpush.msra.mxu0 0.0
        %830 = vmatpush.msra.mxu0 0.0
        %831 = vmatpush.msra.mxu0 0.0
        %832 = vmatpush.msra.mxu0 0.0
        %833 = vmatpush.msra.mxu0 %v557
        %834 = vmatpush.msra.mxu0 %v525
        %835 = vmatpush.msra.mxu0 %v493
        %836 = vmatpush.msra.mxu0 %v461
        %837 = vmatmul.f32.gmra.mxu0 %v579
        %v838 = vpop.f32.mrf.mxu0
        %v839 = vadd.f32 0.0, %v838
        %840 = vdwg.mxu0
        %841 = vmatpush.msra.mxu0 0.0
        %842 = vmatpush.msra.mxu0 0.0
        %843 = vmatpush.msra.mxu0 0.0
        %844 = vmatpush.msra.mxu0 0.0
        %845 = vmatpush.msra.mxu0 0.0
        %846 = vmatpush.msra.mxu0 0.0
        %847 = vmatpush.msra.mxu0 0.0
        %848 = vmatpush.msra.mxu0 0.0
        %849 = vmatpush.msra.mxu0 0.0
        %850 = vmatpush.msra.mxu0 0.0
        %851 = vmatpush.msra.mxu0 0.0
        %852 = vmatpush.msra.mxu0 0.0
        %853 = vmatpush.msra.mxu0 %v558
        %854 = vmatpush.msra.mxu0 %v526
        %855 = vmatpush.msra.mxu0 %v494
        %856 = vmatpush.msra.mxu0 %v462
        %857 = vmatmul.f32.gmra.mxu0 %v579
        %v858 = vpop.f32.mrf.mxu0
        %v859 = vadd.f32 0.0, %v858
        %860 = vdwg.mxu0
        %861 = vmatpush.msra.mxu0 0.0
        %862 = vmatpush.msra.mxu0 0.0
        %863 = vmatpush.msra.mxu0 0.0
        %864 = vmatpush.msra.mxu0 0.0
        %865 = vmatpush.msra.mxu0 0.0
        %866 = vmatpush.msra.mxu0 0.0
        %867 = vmatpush.msra.mxu0 0.0
        %868 = vmatpush.msra.mxu0 0.0
        %869 = vmatpush.msra.mxu0 0.0
        %870 = vmatpush.msra.mxu0 0.0
        %871 = vmatpush.msra.mxu0 0.0
        %872 = vmatpush.msra.mxu0 0.0
        %873 = vmatpush.msra.mxu0 %v559
        %874 = vmatpush.msra.mxu0 %v527
        %875 = vmatpush.msra.mxu0 %v495
        %876 = vmatpush.msra.mxu0 %v463
        %877 = vmatmul.f32.gmra.mxu0 %v579
        %v878 = vpop.f32.mrf.mxu0
        %v879 = vadd.f32 0.0, %v878
        %880 = vdwg.mxu0
        %881 = vmatpush.msra.mxu0 0.0
        %882 = vmatpush.msra.mxu0 0.0
        %883 = vmatpush.msra.mxu0 0.0
        %884 = vmatpush.msra.mxu0 0.0
        %885 = vmatpush.msra.mxu0 0.0
        %886 = vmatpush.msra.mxu0 0.0
        %887 = vmatpush.msra.mxu0 0.0
        %888 = vmatpush.msra.mxu0 0.0
        %889 = vmatpush.msra.mxu0 0.0
        %890 = vmatpush.msra.mxu0 0.0
        %891 = vmatpush.msra.mxu0 0.0
        %892 = vmatpush.msra.mxu0 0.0
        %893 = vmatpush.msra.mxu0 %v560
        %894 = vmatpush.msra.mxu0 %v528
        %895 = vmatpush.msra.mxu0 %v496
        %896 = vmatpush.msra.mxu0 %v464
        %897 = vmatmul.f32.gmra.mxu0 %v579
        %v898 = vpop.f32.mrf.mxu0
        %v899 = vadd.f32 0.0, %v898
        %900 = vdwg.mxu0
        %901 = vmatpush.msra.mxu0 0.0
        %902 = vmatpush.msra.mxu0 0.0
        %903 = vmatpush.msra.mxu0 0.0
        %904 = vmatpush.msra.mxu0 0.0
        %905 = vmatpush.msra.mxu0 0.0
        %906 = vmatpush.msra.mxu0 0.0
        %907 = vmatpush.msra.mxu0 0.0
        %908 = vmatpush.msra.mxu0 0.0
        %909 = vmatpush.msra.mxu0 0.0
        %910 = vmatpush.msra.mxu0 0.0
        %911 = vmatpush.msra.mxu0 0.0
        %912 = vmatpush.msra.mxu0 0.0
        %913 = vmatpush.msra.mxu0 %v561
        %914 = vmatpush.msra.mxu0 %v529
        %915 = vmatpush.msra.mxu0 %v497
        %916 = vmatpush.msra.mxu0 %v465
        %917 = vmatmul.f32.gmra.mxu0 %v579
        %v918 = vpop.f32.mrf.mxu0
        %v919 = vadd.f32 0.0, %v918
        %920 = vdwg.mxu0
        %921 = vmatpush.msra.mxu0 0.0
        %922 = vmatpush.msra.mxu0 0.0
        %923 = vmatpush.msra.mxu0 0.0
        %924 = vmatpush.msra.mxu0 0.0
        %925 = vmatpush.msra.mxu0 0.0
        %926 = vmatpush.msra.mxu0 0.0
        %927 = vmatpush.msra.mxu0 0.0
        %928 = vmatpush.msra.mxu0 0.0
        %929 = vmatpush.msra.mxu0 0.0
        %930 = vmatpush.msra.mxu0 0.0
        %931 = vmatpush.msra.mxu0 0.0
        %932 = vmatpush.msra.mxu0 0.0
        %933 = vmatpush.msra.mxu0 %v562
        %934 = vmatpush.msra.mxu0 %v530
        %935 = vmatpush.msra.mxu0 %v498
        %936 = vmatpush.msra.mxu0 %v466
        %937 = vmatmul.f32.gmra.mxu0 %v579
        %v938 = vpop.f32.mrf.mxu0
        %v939 = vadd.f32 0.0, %v938
        %940 = vdwg.mxu0
        %941 = vmatpush.msra.mxu0 0.0
        %942 = vmatpush.msra.mxu0 0.0
        %943 = vmatpush.msra.mxu0 0.0
        %944 = vmatpush.msra.mxu0 0.0
        %945 = vmatpush.msra.mxu0 0.0
        %946 = vmatpush.msra.mxu0 0.0
        %947 = vmatpush.msra.mxu0 0.0
        %948 = vmatpush.msra.mxu0 0.0
        %949 = vmatpush.msra.mxu0 0.0
        %950 = vmatpush.msra.mxu0 0.0
        %951 = vmatpush.msra.mxu0 0.0
        %952 = vmatpush.msra.mxu0 0.0
        %953 = vmatpush.msra.mxu0 %v563
        %954 = vmatpush.msra.mxu0 %v531
        %955 = vmatpush.msra.mxu0 %v499
        %956 = vmatpush.msra.mxu0 %v467
        %957 = vmatmul.f32.gmra.mxu0 %v579
        %v958 = vpop.f32.mrf.mxu0
        %v959 = vadd.f32 0.0, %v958
        %960 = vdwg.mxu0
        %961 = vmatpush.msra.mxu0 0.0
        %962 = vmatpush.msra.mxu0 0.0
        %963 = vmatpush.msra.mxu0 0.0
        %964 = vmatpush.msra.mxu0 0.0
        %965 = vmatpush.msra.mxu0 0.0
        %966 = vmatpush.msra.mxu0 0.0
        %967 = vmatpush.msra.mxu0 0.0
        %968 = vmatpush.msra.mxu0 0.0
        %969 = vmatpush.msra.mxu0 0.0
        %970 = vmatpush.msra.mxu0 0.0
        %971 = vmatpush.msra.mxu0 0.0
        %972 = vmatpush.msra.mxu0 0.0
        %973 = vmatpush.msra.mxu0 %v564
        %974 = vmatpush.msra.mxu0 %v532
        %975 = vmatpush.msra.mxu0 %v500
        %976 = vmatpush.msra.mxu0 %v468
        %977 = vmatmul.f32.gmra.mxu0 %v579
        %v978 = vpop.f32.mrf.mxu0
        %v979 = vadd.f32 0.0, %v978
        %980 = vdwg.mxu0
        %981 = vmatpush.msra.mxu0 0.0
        %982 = vmatpush.msra.mxu0 0.0
        %983 = vmatpush.msra.mxu0 0.0
        %984 = vmatpush.msra.mxu0 0.0
        %985 = vmatpush.msra.mxu0 0.0
        %986 = vmatpush.msra.mxu0 0.0
        %987 = vmatpush.msra.mxu0 0.0
        %988 = vmatpush.msra.mxu0 0.0
        %989 = vmatpush.msra.mxu0 0.0
        %990 = vmatpush.msra.mxu0 0.0
        %991 = vmatpush.msra.mxu0 0.0
        %992 = vmatpush.msra.mxu0 0.0
        %993 = vmatpush.msra.mxu0 %v565
        %994 = vmatpush.msra.mxu0 %v533
        %995 = vmatpush.msra.mxu0 %v501
        %996 = vmatpush.msra.mxu0 %v469
        %997 = vmatmul.f32.gmra.mxu0 %v579
        %v998 = vpop.f32.mrf.mxu0
        %v999 = vadd.f32 0.0, %v998
        %1000 = vdwg.mxu0
        %1001 = vmatpush.msra.mxu0 0.0
        %1002 = vmatpush.msra.mxu0 0.0
        %1003 = vmatpush.msra.mxu0 0.0
        %1004 = vmatpush.msra.mxu0 0.0
        %1005 = vmatpush.msra.mxu0 0.0
        %1006 = vmatpush.msra.mxu0 0.0
        %1007 = vmatpush.msra.mxu0 0.0
        %1008 = vmatpush.msra.mxu0 0.0
        %1009 = vmatpush.msra.mxu0 0.0
        %1010 = vmatpush.msra.mxu0 0.0
        %1011 = vmatpush.msra.mxu0 0.0
        %1012 = vmatpush.msra.mxu0 0.0
        %1013 = vmatpush.msra.mxu0 %v566
        %1014 = vmatpush.msra.mxu0 %v534
        %1015 = vmatpush.msra.mxu0 %v502
        %1016 = vmatpush.msra.mxu0 %v470
        %1017 = vmatmul.f32.gmra.mxu0 %v579
        %v1018 = vpop.f32.mrf.mxu0
        %v1019 = vadd.f32 0.0, %v1018
        %1020 = vdwg.mxu0
        %1021 = vmatpush.msra.mxu0 0.0
        %1022 = vmatpush.msra.mxu0 0.0
        %1023 = vmatpush.msra.mxu0 0.0
        %1024 = vmatpush.msra.mxu0 0.0
        %1025 = vmatpush.msra.mxu0 0.0
        %1026 = vmatpush.msra.mxu0 0.0
        %1027 = vmatpush.msra.mxu0 0.0
        %1028 = vmatpush.msra.mxu0 0.0
        %1029 = vmatpush.msra.mxu0 0.0
        %1030 = vmatpush.msra.mxu0 0.0
        %1031 = vmatpush.msra.mxu0 0.0
        %1032 = vmatpush.msra.mxu0 0.0
        %1033 = vmatpush.msra.mxu0 %v567
        %1034 = vmatpush.msra.mxu0 %v535
        %1035 = vmatpush.msra.mxu0 %v503
        %1036 = vmatpush.msra.mxu0 %v471
        %1037 = vmatmul.f32.gmra.mxu0 %v579
        %v1038 = vpop.f32.mrf.mxu0
        %v1039 = vadd.f32 0.0, %v1038
        %1040 = vdwg.mxu0
        %1041 = vmatpush.msra.mxu0 0.0
        %1042 = vmatpush.msra.mxu0 0.0
        %1043 = vmatpush.msra.mxu0 0.0
        %1044 = vmatpush.msra.mxu0 0.0
        %1045 = vmatpush.msra.mxu0 0.0
        %1046 = vmatpush.msra.mxu0 0.0
        %1047 = vmatpush.msra.mxu0 0.0
        %1048 = vmatpush.msra.mxu0 0.0
        %1049 = vmatpush.msra.mxu0 0.0
        %1050 = vmatpush.msra.mxu0 0.0
        %1051 = vmatpush.msra.mxu0 0.0
        %1052 = vmatpush.msra.mxu0 0.0
        %1053 = vmatpush.msra.mxu0 %v568
        %1054 = vmatpush.msra.mxu0 %v536
        %1055 = vmatpush.msra.mxu0 %v504
        %1056 = vmatpush.msra.mxu0 %v472
        %1057 = vmatmul.f32.gmra.mxu0 %v579
        %v1058 = vpop.f32.mrf.mxu0
        %v1059 = vadd.f32 0.0, %v1058
        %1060 = vdwg.mxu0
        %1061 = vmatpush.msra.mxu0 0.0
        %1062 = vmatpush.msra.mxu0 0.0
        %1063 = vmatpush.msra.mxu0 0.0
        %1064 = vmatpush.msra.mxu0 0.0
        %1065 = vmatpush.msra.mxu0 0.0
        %1066 = vmatpush.msra.mxu0 0.0
        %1067 = vmatpush.msra.mxu0 0.0
        %1068 = vmatpush.msra.mxu0 0.0
        %1069 = vmatpush.msra.mxu0 0.0
        %1070 = vmatpush.msra.mxu0 0.0
        %1071 = vmatpush.msra.mxu0 0.0
        %1072 = vmatpush.msra.mxu0 0.0
        %1073 = vmatpush.msra.mxu0 %v569
        %1074 = vmatpush.msra.mxu0 %v537
        %1075 = vmatpush.msra.mxu0 %v505
        %1076 = vmatpush.msra.mxu0 %v473
        %1077 = vmatmul.f32.gmra.mxu0 %v579
        %v1078 = vpop.f32.mrf.mxu0
        %v1079 = vadd.f32 0.0, %v1078
        %1080 = vdwg.mxu0
        %1081 = vmatpush.msra.mxu0 0.0
        %1082 = vmatpush.msra.mxu0 0.0
        %1083 = vmatpush.msra.mxu0 0.0
        %1084 = vmatpush.msra.mxu0 0.0
        %1085 = vmatpush.msra.mxu0 0.0
        %1086 = vmatpush.msra.mxu0 0.0
        %1087 = vmatpush.msra.mxu0 0.0
        %1088 = vmatpush.msra.mxu0 0.0
        %1089 = vmatpush.msra.mxu0 0.0
        %1090 = vmatpush.msra.mxu0 0.0
        %1091 = vmatpush.msra.mxu0 0.0
        %1092 = vmatpush.msra.mxu0 0.0
        %1093 = vmatpush.msra.mxu0 %v570
        %1094 = vmatpush.msra.mxu0 %v538
        %1095 = vmatpush.msra.mxu0 %v506
        %1096 = vmatpush.msra.mxu0 %v474
        %1097 = vmatmul.f32.gmra.mxu0 %v579
        %v1098 = vpop.f32.mrf.mxu0
        %v1099 = vadd.f32 0.0, %v1098
        %1100 = vdwg.mxu0
        %1101 = vmatpush.msra.mxu0 0.0
        %1102 = vmatpush.msra.mxu0 0.0
        %1103 = vmatpush.msra.mxu0 0.0
        %1104 = vmatpush.msra.mxu0 0.0
        %1105 = vmatpush.msra.mxu0 0.0
        %1106 = vmatpush.msra.mxu0 0.0
        %1107 = vmatpush.msra.mxu0 0.0
        %1108 = vmatpush.msra.mxu0 0.0
        %1109 = vmatpush.msra.mxu0 0.0
        %1110 = vmatpush.msra.mxu0 0.0
        %1111 = vmatpush.msra.mxu0 0.0
        %1112 = vmatpush.msra.mxu0 0.0
        %1113 = vmatpush.msra.mxu0 %v571
        %1114 = vmatpush.msra.mxu0 %v539
        %1115 = vmatpush.msra.mxu0 %v507
        %1116 = vmatpush.msra.mxu0 %v475
        %1117 = vmatmul.f32.gmra.mxu0 %v579
        %v1118 = vpop.f32.mrf.mxu0
        %v1119 = vadd.f32 0.0, %v1118
        %1120 = vdwg.mxu0
        %1121 = vmatpush.msra.mxu0 0.0
        %1122 = vmatpush.msra.mxu0 0.0
        %1123 = vmatpush.msra.mxu0 0.0
        %1124 = vmatpush.msra.mxu0 0.0
        %1125 = vmatpush.msra.mxu0 0.0
        %1126 = vmatpush.msra.mxu0 0.0
        %1127 = vmatpush.msra.mxu0 0.0
        %1128 = vmatpush.msra.mxu0 0.0
        %1129 = vmatpush.msra.mxu0 0.0
        %1130 = vmatpush.msra.mxu0 0.0
        %1131 = vmatpush.msra.mxu0 0.0
        %1132 = vmatpush.msra.mxu0 0.0
        %1133 = vmatpush.msra.mxu0 %v572
        %1134 = vmatpush.msra.mxu0 %v540
        %1135 = vmatpush.msra.mxu0 %v508
        %1136 = vmatpush.msra.mxu0 %v476
        %1137 = vmatmul.f32.gmra.mxu0 %v579
        %v1138 = vpop.f32.mrf.mxu0
        %v1139 = vadd.f32 0.0, %v1138
        %1140 = vdwg.mxu0
        %1141 = vmatpush.msra.mxu0 0.0
        %1142 = vmatpush.msra.mxu0 0.0
        %1143 = vmatpush.msra.mxu0 0.0
        %1144 = vmatpush.msra.mxu0 0.0
        %1145 = vmatpush.msra.mxu0 0.0
        %1146 = vmatpush.msra.mxu0 0.0
        %1147 = vmatpush.msra.mxu0 0.0
        %1148 = vmatpush.msra.mxu0 0.0
        %1149 = vmatpush.msra.mxu0 0.0
        %1150 = vmatpush.msra.mxu0 0.0
        %1151 = vmatpush.msra.mxu0 0.0
        %1152 = vmatpush.msra.mxu0 0.0
        %1153 = vmatpush.msra.mxu0 %v573
        %1154 = vmatpush.msra.mxu0 %v541
        %1155 = vmatpush.msra.mxu0 %v509
        %1156 = vmatpush.msra.mxu0 %v477
        %1157 = vmatmul.f32.gmra.mxu0 %v579
        %v1158 = vpop.f32.mrf.mxu0
        %v1159 = vadd.f32 0.0, %v1158
        %1160 = vdwg.mxu0
        %1161 = vmatpush.msra.mxu0 0.0
        %1162 = vmatpush.msra.mxu0 0.0
        %1163 = vmatpush.msra.mxu0 0.0
        %1164 = vmatpush.msra.mxu0 0.0
        %1165 = vmatpush.msra.mxu0 0.0
        %1166 = vmatpush.msra.mxu0 0.0
        %1167 = vmatpush.msra.mxu0 0.0
        %1168 = vmatpush.msra.mxu0 0.0
        %1169 = vmatpush.msra.mxu0 0.0
        %1170 = vmatpush.msra.mxu0 0.0
        %1171 = vmatpush.msra.mxu0 0.0
        %1172 = vmatpush.msra.mxu0 0.0
        %1173 = vmatpush.msra.mxu0 %v574
        %1174 = vmatpush.msra.mxu0 %v542
        %1175 = vmatpush.msra.mxu0 %v510
        %1176 = vmatpush.msra.mxu0 %v478
        %1177 = vmatmul.f32.gmra.mxu0 %v579
        %v1178 = vpop.f32.mrf.mxu0
        %v1179 = vadd.f32 0.0, %v1178
        %1180 = vdwg.mxu0
        %1181 = vmatpush.msra.mxu0 0.0
        %1182 = vmatpush.msra.mxu0 0.0
        %1183 = vmatpush.msra.mxu0 0.0
        %1184 = vmatpush.msra.mxu0 0.0
        %1185 = vmatpush.msra.mxu0 0.0
        %1186 = vmatpush.msra.mxu0 0.0
        %1187 = vmatpush.msra.mxu0 0.0
        %1188 = vmatpush.msra.mxu0 0.0
        %1189 = vmatpush.msra.mxu0 0.0
        %1190 = vmatpush.msra.mxu0 0.0
        %1191 = vmatpush.msra.mxu0 0.0
        %1192 = vmatpush.msra.mxu0 0.0
        %1193 = vmatpush.msra.mxu0 %v575
        %1194 = vmatpush.msra.mxu0 %v543
        %1195 = vmatpush.msra.mxu0 %v511
        %1196 = vmatpush.msra.mxu0 %v479
        %1197 = vmatmul.f32.gmra.mxu0 %v579
        %v1198 = vpop.f32.mrf.mxu0
        %v1199 = vadd.f32 0.0, %v1198
        %1200 = vdwg.mxu0
        %1201 = vmatpush.msra.mxu0 0.0
        %1202 = vmatpush.msra.mxu0 0.0
        %1203 = vmatpush.msra.mxu0 0.0
        %1204 = vmatpush.msra.mxu0 0.0
        %1205 = vmatpush.msra.mxu0 0.0
        %1206 = vmatpush.msra.mxu0 0.0
        %1207 = vmatpush.msra.mxu0 0.0
        %1208 = vmatpush.msra.mxu0 0.0
        %1209 = vmatpush.msra.mxu0 0.0
        %1210 = vmatpush.msra.mxu0 0.0
        %1211 = vmatpush.msra.mxu0 0.0
        %1212 = vmatpush.msra.mxu0 0.0
        %1213 = vmatpush.msra.mxu0 %v576
        %1214 = vmatpush.msra.mxu0 %v544
        %1215 = vmatpush.msra.mxu0 %v512
        %1216 = vmatpush.msra.mxu0 %v480
        %1217 = vmatmul.f32.gmra.mxu0 %v579
        %v1218 = vpop.f32.mrf.mxu0
        %v1219 = vadd.f32 0.0, %v1218
        %1220 = vdwg.mxu0
        %v1221 = vld [vmem:[%s382] sm:$0xff]
        %vm1222 = vcmp.eq.s32.totalorder %v386, 0
        %v1223 = vsel %vm1222, %v1221, 0.0
        %v1224 = vsel %vm577, %v1223, 0.0
        %1225 = vadd.xlane.f32.xlu0 %v1224
        %v1226 = vpop.xlane.xlu0 %1225
        %v1227 = vmul.f32 %v599, %v1226
        %v1228 = vadd.f32 %v1227, 0.0
        %vm1229 = vcmp.eq.s32.totalorder %v386, 1
        %v1230 = vsel %vm1229, %v1221, 0.0
        %v1231 = vsel %vm577, %v1230, 0.0
        %1232 = vadd.xlane.f32.xlu0 %v1231
        %v1233 = vpop.xlane.xlu0 %1232
        %v1234 = vmul.f32 %v619, %v1233
        %v1235 = vadd.f32 %v1228, %v1234
        %vm1236 = vcmp.eq.s32.totalorder %v386, 2
        %v1237 = vsel %vm1236, %v1221, 0.0
        %v1238 = vsel %vm577, %v1237, 0.0
        %1239 = vadd.xlane.f32.xlu0 %v1238
        %v1240 = vpop.xlane.xlu0 %1239
        %v1241 = vmul.f32 %v639, %v1240
        %v1242 = vadd.f32 %v1235, %v1241
        %vm1243 = vcmp.eq.s32.totalorder %v386, 3
        %v1244 = vsel %vm1243, %v1221, 0.0
        %v1245 = vsel %vm577, %v1244, 0.0
        %1246 = vadd.xlane.f32.xlu0 %v1245
        %v1247 = vpop.xlane.xlu0 %1246
        %v1248 = vmul.f32 %v659, %v1247
        %v1249 = vadd.f32 %v1242, %v1248
        %vm1250 = vcmp.eq.s32.totalorder %v386, 4
        %v1251 = vsel %vm1250, %v1221, 0.0
        %v1252 = vsel %vm577, %v1251, 0.0
        %1253 = vadd.xlane.f32.xlu0 %v1252
        %v1254 = vpop.xlane.xlu0 %1253
        %v1255 = vmul.f32 %v679, %v1254
        %v1256 = vadd.f32 %v1249, %v1255
        %vm1257 = vcmp.eq.s32.totalorder %v386, 5
        %v1258 = vsel %vm1257, %v1221, 0.0
        %v1259 = vsel %vm577, %v1258, 0.0
        %1260 = vadd.xlane.f32.xlu0 %v1259
        %v1261 = vpop.xlane.xlu0 %1260
        %v1262 = vmul.f32 %v699, %v1261
        %v1263 = vadd.f32 %v1256, %v1262
        %vm1264 = vcmp.eq.s32.totalorder %v386, 6
        %v1265 = vsel %vm1264, %v1221, 0.0
        %v1266 = vsel %vm577, %v1265, 0.0
        %1267 = vadd.xlane.f32.xlu0 %v1266
        %v1268 = vpop.xlane.xlu0 %1267
        %v1269 = vmul.f32 %v719, %v1268
        %v1270 = vadd.f32 %v1263, %v1269
        %vm1271 = vcmp.eq.s32.totalorder %v386, 7
        %v1272 = vsel %vm1271, %v1221, 0.0
        %v1273 = vsel %vm577, %v1272, 0.0
        %1274 = vadd.xlane.f32.xlu0 %v1273
        %v1275 = vpop.xlane.xlu0 %1274
        %v1276 = vmul.f32 %v739, %v1275
        %v1277 = vadd.f32 %v1270, %v1276
        %vm1278 = vcmp.eq.s32.totalorder %v386, 8
        %v1279 = vsel %vm1278, %v1221, 0.0
        %v1280 = vsel %vm577, %v1279, 0.0
        %1281 = vadd.xlane.f32.xlu0 %v1280
        %v1282 = vpop.xlane.xlu0 %1281
        %v1283 = vmul.f32 %v759, %v1282
        %v1284 = vadd.f32 %v1277, %v1283
        %vm1285 = vcmp.eq.s32.totalorder %v386, 9
        %v1286 = vsel %vm1285, %v1221, 0.0
        %v1287 = vsel %vm577, %v1286, 0.0
        %1288 = vadd.xlane.f32.xlu0 %v1287
        %v1289 = vpop.xlane.xlu0 %1288
        %v1290 = vmul.f32 %v779, %v1289
        %v1291 = vadd.f32 %v1284, %v1290
        %vm1292 = vcmp.eq.s32.totalorder %v386, 10
        %v1293 = vsel %vm1292, %v1221, 0.0
        %v1294 = vsel %vm577, %v1293, 0.0
        %1295 = vadd.xlane.f32.xlu0 %v1294
        %v1296 = vpop.xlane.xlu0 %1295
        %v1297 = vmul.f32 %v799, %v1296
        %v1298 = vadd.f32 %v1291, %v1297
        %vm1299 = vcmp.eq.s32.totalorder %v386, 11
        %v1300 = vsel %vm1299, %v1221, 0.0
        %v1301 = vsel %vm577, %v1300, 0.0
        %1302 = vadd.xlane.f32.xlu0 %v1301
        %v1303 = vpop.xlane.xlu0 %1302
        %v1304 = vmul.f32 %v819, %v1303
        %v1305 = vadd.f32 %v1298, %v1304
        %vm1306 = vcmp.eq.s32.totalorder %v386, 12
        %v1307 = vsel %vm1306, %v1221, 0.0
        %v1308 = vsel %vm577, %v1307, 0.0
        %1309 = vadd.xlane.f32.xlu0 %v1308
        %v1310 = vpop.xlane.xlu0 %1309
        %v1311 = vmul.f32 %v839, %v1310
        %v1312 = vadd.f32 %v1305, %v1311
        %vm1313 = vcmp.eq.s32.totalorder %v386, 13
        %v1314 = vsel %vm1313, %v1221, 0.0
        %v1315 = vsel %vm577, %v1314, 0.0
        %1316 = vadd.xlane.f32.xlu0 %v1315
        %v1317 = vpop.xlane.xlu0 %1316
        %v1318 = vmul.f32 %v859, %v1317
        %v1319 = vadd.f32 %v1312, %v1318
        %vm1320 = vcmp.eq.s32.totalorder %v386, 14
        %v1321 = vsel %vm1320, %v1221, 0.0
        %v1322 = vsel %vm577, %v1321, 0.0
        %1323 = vadd.xlane.f32.xlu0 %v1322
        %v1324 = vpop.xlane.xlu0 %1323
        %v1325 = vmul.f32 %v879, %v1324
        %v1326 = vadd.f32 %v1319, %v1325
        %vm1327 = vcmp.eq.s32.totalorder %v386, 15
        %v1328 = vsel %vm1327, %v1221, 0.0
        %v1329 = vsel %vm577, %v1328, 0.0
        %1330 = vadd.xlane.f32.xlu0 %v1329
        %v1331 = vpop.xlane.xlu0 %1330
        %v1332 = vmul.f32 %v899, %v1331
        %v1333 = vadd.f32 %v1326, %v1332
        %vm1334 = vcmp.eq.s32.totalorder %v386, 16
        %v1335 = vsel %vm1334, %v1221, 0.0
        %v1336 = vsel %vm577, %v1335, 0.0
        %1337 = vadd.xlane.f32.xlu0 %v1336
        %v1338 = vpop.xlane.xlu0 %1337
        %v1339 = vmul.f32 %v919, %v1338
        %v1340 = vadd.f32 %v1333, %v1339
        %vm1341 = vcmp.eq.s32.totalorder %v386, 17
        %v1342 = vsel %vm1341, %v1221, 0.0
        %v1343 = vsel %vm577, %v1342, 0.0
        %1344 = vadd.xlane.f32.xlu0 %v1343
        %v1345 = vpop.xlane.xlu0 %1344
        %v1346 = vmul.f32 %v939, %v1345
        %v1347 = vadd.f32 %v1340, %v1346
        %vm1348 = vcmp.eq.s32.totalorder %v386, 18
        %v1349 = vsel %vm1348, %v1221, 0.0
        %v1350 = vsel %vm577, %v1349, 0.0
        %1351 = vadd.xlane.f32.xlu0 %v1350
        %v1352 = vpop.xlane.xlu0 %1351
        %v1353 = vmul.f32 %v959, %v1352
        %v1354 = vadd.f32 %v1347, %v1353
        %vm1355 = vcmp.eq.s32.totalorder %v386, 19
        %v1356 = vsel %vm1355, %v1221, 0.0
        %v1357 = vsel %vm577, %v1356, 0.0
        %1358 = vadd.xlane.f32.xlu0 %v1357
        %v1359 = vpop.xlane.xlu0 %1358
        %v1360 = vmul.f32 %v979, %v1359
        %v1361 = vadd.f32 %v1354, %v1360
        %vm1362 = vcmp.eq.s32.totalorder %v386, 20
        %v1363 = vsel %vm1362, %v1221, 0.0
        %v1364 = vsel %vm577, %v1363, 0.0
        %1365 = vadd.xlane.f32.xlu0 %v1364
        %v1366 = vpop.xlane.xlu0 %1365
        %v1367 = vmul.f32 %v999, %v1366
        %v1368 = vadd.f32 %v1361, %v1367
        %vm1369 = vcmp.eq.s32.totalorder %v386, 21
        %v1370 = vsel %vm1369, %v1221, 0.0
        %v1371 = vsel %vm577, %v1370, 0.0
        %1372 = vadd.xlane.f32.xlu0 %v1371
        %v1373 = vpop.xlane.xlu0 %1372
        %v1374 = vmul.f32 %v1019, %v1373
        %v1375 = vadd.f32 %v1368, %v1374
        %vm1376 = vcmp.eq.s32.totalorder %v386, 22
        %v1377 = vsel %vm1376, %v1221, 0.0
        %v1378 = vsel %vm577, %v1377, 0.0
        %1379 = vadd.xlane.f32.xlu0 %v1378
        %v1380 = vpop.xlane.xlu0 %1379
        %v1381 = vmul.f32 %v1039, %v1380
        %v1382 = vadd.f32 %v1375, %v1381
        %vm1383 = vcmp.eq.s32.totalorder %v386, 23
        %v1384 = vsel %vm1383, %v1221, 0.0
        %v1385 = vsel %vm577, %v1384, 0.0
        %1386 = vadd.xlane.f32.xlu0 %v1385
        %v1387 = vpop.xlane.xlu0 %1386
        %v1388 = vmul.f32 %v1059, %v1387
        %v1389 = vadd.f32 %v1382, %v1388
        %vm1390 = vcmp.eq.s32.totalorder %v386, 24
        %v1391 = vsel %vm1390, %v1221, 0.0
        %v1392 = vsel %vm577, %v1391, 0.0
        %1393 = vadd.xlane.f32.xlu0 %v1392
        %v1394 = vpop.xlane.xlu0 %1393
        %v1395 = vmul.f32 %v1079, %v1394
        %v1396 = vadd.f32 %v1389, %v1395
        %vm1397 = vcmp.eq.s32.totalorder %v386, 25
        %v1398 = vsel %vm1397, %v1221, 0.0
        %v1399 = vsel %vm577, %v1398, 0.0
        %1400 = vadd.xlane.f32.xlu0 %v1399
        %v1401 = vpop.xlane.xlu0 %1400
        %v1402 = vmul.f32 %v1099, %v1401
        %v1403 = vadd.f32 %v1396, %v1402
        %vm1404 = vcmp.eq.s32.totalorder %v386, 26
        %v1405 = vsel %vm1404, %v1221, 0.0
        %v1406 = vsel %vm577, %v1405, 0.0
        %1407 = vadd.xlane.f32.xlu0 %v1406
        %v1408 = vpop.xlane.xlu0 %1407
        %v1409 = vmul.f32 %v1119, %v1408
        %v1410 = vadd.f32 %v1403, %v1409
        %vm1411 = vcmp.eq.s32.totalorder %v386, 27
        %v1412 = vsel %vm1411, %v1221, 0.0
        %v1413 = vsel %vm577, %v1412, 0.0
        %1414 = vadd.xlane.f32.xlu0 %v1413
        %v1415 = vpop.xlane.xlu0 %1414
        %v1416 = vmul.f32 %v1139, %v1415
        %v1417 = vadd.f32 %v1410, %v1416
        %vm1418 = vcmp.eq.s32.totalorder %v386, 28
        %v1419 = vsel %vm1418, %v1221, 0.0
        %v1420 = vsel %vm577, %v1419, 0.0
        %1421 = vadd.xlane.f32.xlu0 %v1420
        %v1422 = vpop.xlane.xlu0 %1421
        %v1423 = vmul.f32 %v1159, %v1422
        %v1424 = vadd.f32 %v1417, %v1423
        %vm1425 = vcmp.eq.s32.totalorder %v386, 29
        %v1426 = vsel %vm1425, %v1221, 0.0
        %v1427 = vsel %vm577, %v1426, 0.0
        %1428 = vadd.xlane.f32.xlu0 %v1427
        %v1429 = vpop.xlane.xlu0 %1428
        %v1430 = vmul.f32 %v1179, %v1429
        %v1431 = vadd.f32 %v1424, %v1430
        %vm1432 = vcmp.eq.s32.totalorder %v386, 30
        %v1433 = vsel %vm1432, %v1221, 0.0
        %v1434 = vsel %vm577, %v1433, 0.0
        %1435 = vadd.xlane.f32.xlu0 %v1434
        %v1436 = vpop.xlane.xlu0 %1435
        %v1437 = vmul.f32 %v1199, %v1436
        %v1438 = vadd.f32 %v1431, %v1437
        %vm1439 = vcmp.eq.s32.totalorder %v386, 31
        %v1440 = vsel %vm1439, %v1221, 0.0
        %v1441 = vsel %vm577, %v1440, 0.0
        %1442 = vadd.xlane.f32.xlu0 %v1441
        %v1443 = vpop.xlane.xlu0 %1442
        %v1444 = vmul.f32 %v1219, %v1443
        %v1445 = vadd.f32 %v1438, %v1444
        %v1446 = vld [vmem:[%s5] sm:$0x1]
        %v1448 = vperm.slane %v1446, 0
        %v1450 = vadd.f32 %v1445, %v1448
        %1451 = vmax.xlane.f32.xlu0 %v1450
        %v1452 = vpop.xlane.xlu0 %1451
        %vm1453 = vcmp.eq.f32.partialorder %v1450, %v1452
        %v1454 = vsel %vm1453, %v386, 128
        %v1455 = vand.u32 %v1454, 65535
        %v1456 = vshra.s32 %v1454, 16
        %v1457 = vcvt.s32.f32 %v1455
        %v1458 = vcvt.s32.f32 %v1456
        %1459 = vmin.xlane.f32.xlu0 %v1458
        %v1460 = vpop.xlane.xlu0 %1459
        %vm1461 = vcmp.eq.f32.partialorder %v1458, %v1460
        %v1462 = vsel %vm1461, %v1457, inf
        %1463 = vmin.xlane.f32.xlu0 %v1462
        %v1464 = vpop.xlane.xlu0 %1463
        %v1465 = vcvt.f32.s32 %v1464
        %v1466 = vcvt.f32.s32 %v1460
        %v1467 = vshll.u32 %v1466, 16
        %v1468 = vadd.s32 %v1467, %v1465
        %vm1469 = vcmp.eq.s32.totalorder %v388, %v386
        %v1470 = vcvt.s32.f32 %v421
        %v1471 = vsel %vm1469, %v1470, 0.0
        %v1472 = vsel %vm401, %v1471, 0.0
        %v1473 = vrot.slane %v1472, 4
        %v1474 = vadd.f32 %v1472, %v1473
        %v1475 = vrot.slane %v1474, 2
        %v1476 = vadd.f32 %v1474, %v1475
        %v1477 = vrot.slane %v1476, 1
        %v1478 = vadd.f32 %v1476, %v1477
        %v1479 = vcvt.s32.f32 %v1468
        %v1480 = vsel %vm1469, %v1479, 0.0
        %v1481 = vsel %vm401, %v1480, 0.0
        %v1482 = vrot.slane %v1481, 4
        %v1483 = vadd.f32 %v1481, %v1482
        %v1484 = vrot.slane %v1483, 2
        %v1485 = vadd.f32 %v1483, %v1484
        %v1486 = vrot.slane %v1485, 1
        %v1487 = vadd.f32 %v1485, %v1486
        %v1488 = vcvt.f32.s32.to.zero.pseudo %v1478
        %vm1489 = vcmask 57344
        %1490 = vst.msk [vmem:[%s351] sm:$0x1] %vm1489, %v1488
        %v1491 = vcvt.f32.s32.to.zero.pseudo %v1487
        %1492 = vst.msk [vmem:[%s357] sm:$0x1] %vm1489, %v1491
        %s1493 = sand.u32 %s199, 1
        %s1494 = scalar_lea.sflag [#allocation3], %s1493
        %s1495 = sand.u32 %s199, 1
        %s1496 = scalar_lea.vmem [#allocation2], %s1495
        %s1497 = sand.u32 %s227, 1
        %s1498 = scalar_lea.sflag [#allocation5], %s1497
        %s1499 = sand.u32 %s227, 1
        %s1500 = scalar_lea.vmem [#allocation4], %s1499
        // Predicated region
        $region45: #{greedy_decoding_pallas.1} parent=43 // pred_check
          %p1501 = pneg %p209
        $region46: #{greedy_decoding_pallas.1} parent=43 // pred_check_branch
          %1503 = sbr.rel (%p1501) target = $region48
        $region47: #{greedy_decoding_pallas.1} parent=43 // pred_region
          %1505 = vsyncadd %s1494, 0
          %s1506 = sadd.s32 %s30, %s29
          %s1507 = scalar_lea.hbm %s6, %s1506
          %s1509 = sshll.u32 %s1496, 4
          %s1510 = int_to_ptr.vmem [resolvable:$true] %s1509
          %s1511 = sshll.u32 %s1507, 4
          %s1512 = int_to_ptr.hbm [resolvable:$true] %s1511
          %1514 = dma.vmem_to_hbm [thread:$0]  %s1510, 16, %s1512, %s1494
        $region48: #{greedy_decoding_pallas.1} parent=43 // pred_fallthru
          _
        // Predicated region
        $region49: #{greedy_decoding_pallas.1} parent=43 // pred_check
          %p1515 = pneg %p237
        $region50: #{greedy_decoding_pallas.1} parent=43 // pred_check_branch
          %1517 = sbr.rel (%p1515) target = $region52
        $region51: #{greedy_decoding_pallas.1} parent=43 // pred_region
          %1519 = vsyncadd %s1498, 0
          %s1520 = sadd.s32 %s30, %s29
          %s1521 = scalar_lea.hbm %s7, %s1520
          %s1523 = sshll.u32 %s1500, 4
          %s1524 = int_to_ptr.vmem [resolvable:$true] %s1523
          %s1525 = sshll.u32 %s1521, 4
          %s1526 = int_to_ptr.hbm [resolvable:$true] %s1525
          %1528 = dma.vmem_to_hbm [thread:$0]  %s1524, 16, %s1526, %s1498
        $region52: #{greedy_decoding_pallas.1} parent=43 // pred_fallthru
          _
      $region44: #{greedy_decoding_pallas.1} parent=5 // pred_fallthru
        _
      %p1529 = scmp.le.s32.totalorder 2, %s20
      // Predicated region
      $region53: #{greedy_decoding_pallas.1} parent=5 // pred_check
        %p1530 = pneg %p1529
      $region54: #{greedy_decoding_pallas.1} parent=5 // pred_check_branch
        %1532 = sbr.rel (%p1530) target = $region56
      $region55: #{greedy_decoding_pallas.1} parent=5 // pred_region
        %s1533 = ssub.s32 %s20, 2
        // Predicated region
        $region57: #{greedy_decoding_pallas.1} parent=55 // pred_check
          %p1534 = pneg %p215
        $region58: #{greedy_decoding_pallas.1} parent=55 // pred_check_branch
          %1536 = sbr.rel (%p1534) target = $region60
        $region59: #{greedy_decoding_pallas.1} parent=55 // pred_region
          %s1537 = sand.u32 %s200, 1
          %s1538 = scalar_lea.sflag [#allocation3], %s1537
          %s1539 = sand.u32 %s200, 1
          %s1540 = scalar_lea.vmem [#allocation2], %s1539
          %1542 = dma.done %s1538, 16
        $region60: #{greedy_decoding_pallas.1} parent=55 // pred_fallthru
          _
        // Predicated region
        $region61: #{greedy_decoding_pallas.1} parent=55 // pred_check
          %p1543 = pneg %p243
        $region62: #{greedy_decoding_pallas.1} parent=55 // pred_check_branch
          %1545 = sbr.rel (%p1543) target = $region64
        $region63: #{greedy_decoding_pallas.1} parent=55 // pred_region
          %s1546 = sand.u32 %s228, 1
          %s1547 = scalar_lea.sflag [#allocation5], %s1546
          %s1548 = sand.u32 %s228, 1
          %s1549 = scalar_lea.vmem [#allocation4], %s1548
          %1551 = dma.done %s1547, 16
        $region64: #{greedy_decoding_pallas.1} parent=55 // pred_fallthru
          _
      $region56: #{greedy_decoding_pallas.1} parent=5 // pred_fallthru
        _
    $region6: #{greedy_decoding_pallas.1} parent=1 // loop_footer
      %s24 = sadd.s32 1, %s20
    $region7: #{greedy_decoding_pallas.1} parent=1 // loop_footer_branch
      %19 = sbr.rel target = $region3
    $region8: #{greedy_decoding_pallas.1} parent=1 // loop_exit
      _
    %1552 = vsyncpa [#allocation3], 1
    %s1553 = scalar_lea.sflag [#allocation3], 1
    %1554 = vsyncpa %s1553, 1
    %1555 = vsyncpa [#allocation5], 1
    %s1556 = scalar_lea.sflag [#allocation5], 1
    %1557 = vsyncpa %s1556, 1

</llo_original>
